<compile_context>
chip_gen: v7x
topology: tpu7x:2x2x1
jax: 0.10.0
libtpu: 0.0.40
codegen_flags: <defaults>
</compile_context>

<pallas_src>
import functools

import jax
import jax.numpy as jnp
from jax import lax
from jax.experimental import pallas as pl
from jax.experimental.pallas import tpu as pltpu

S = 8           # sequence length (number of "video" tokens)
E_HALF = 16     # previous_video_feats feature dim
E = 2 * E_HALF  # d_model after cat((prev, prev), dim=1)   (stand-in for 1027)
H = 4           # nhead (stand-in for 8)
DH = E // H     # per-head dim
F = 64          # dim_feedforward (stand-in for 2048)
N_LAYERS = 2    # num_layers (stand-in for 6)
EPS = 1e-5      # LayerNorm eps (PyTorch default)
OUT_PAD = 128   # lane-dense output slab width


def _layer_norm(x, w, b):
    mu = jnp.mean(x, axis=-1, keepdims=True)
    var = jnp.mean((x - mu) ** 2, axis=-1, keepdims=True)
    return (x - mu) * lax.rsqrt(var + EPS) * w + b


def fused_forward_kernel(prev_ref, wqkv_ref, bqkv_ref, wo_ref, w1_ref, b1_ref,
                         w2_ref, vecE_ref, lin_w_ref, lin_b_ref, o_ref):
    """cat(prev, prev) -> N_LAYERS x TransformerEncoderLayer -> Linear(E, 1)."""
    prev = prev_ref[...]                                   # (S, E_HALF)
    x = jnp.concatenate([prev, prev], axis=-1)             # (S, E) in-kernel concat

    scale = 1.0 / jnp.sqrt(jnp.float32(DH))
    for l in range(N_LAYERS):                              # static layer loop
        wqkv = wqkv_ref[l]                                 # (E, 3E)
        bqkv = bqkv_ref[l]                                 # (1, 3E)
        wo = wo_ref[l]                                     # (E, E)
        w1 = w1_ref[l]                                     # (E, F)
        b1 = b1_ref[l]                                     # (1, F)
        w2 = w2_ref[l]                                     # (F, E)
        vecs = vecE_ref[l]                                 # (6, E) packed vectors
        bo, ln1w, ln1b = vecs[0:1], vecs[1:2], vecs[2:3]
        b2, ln2w, ln2b = vecs[3:4], vecs[4:5], vecs[5:6]

        # --- fused Q/K/V projection (one MXU push, N = 3E) ----------------
        qkv = jnp.dot(x, wqkv, preferred_element_type=jnp.float32) + bqkv
        q = qkv[:, 0:E]
        k = qkv[:, E:2 * E]
        v = qkv[:, 2 * E:3 * E]

        # --- multi-head attention: per-head ctx into lane slices ----------
        ctx_parts = []
        for h in range(H):
            sl = slice(h * DH, (h + 1) * DH)
            qh, kh, vh = q[:, sl], k[:, sl], v[:, sl]
            # contraction over last axes of both operands -> no kh.T transpose
            scores = lax.dot_general(
                qh, kh, (((1,), (1,)), ((), ())),
                preferred_element_type=jnp.float32) * scale
            m = jnp.max(scores, axis=-1, keepdims=True)
            p = jnp.exp(scores - m)
            inv = pl.reciprocal(jnp.sum(p, axis=-1, keepdims=True), approx=True)
            attn = p * inv                                               # (S, S)
            ctx_parts.append(jnp.dot(attn, vh,
                                     preferred_element_type=jnp.float32))
        ctx = jnp.concatenate(ctx_parts, axis=-1)                        # (S, E)
        # single output projection (K = E) instead of H small folded matmuls
        attn_out = jnp.dot(ctx, wo, preferred_element_type=jnp.float32) + bo

        # --- residual + LayerNorm 1 (post-LN) ------------------------------
        x1 = _layer_norm(x + attn_out, ln1w, ln1b)

        # --- feed-forward: Linear -> ReLU -> Linear -------------------------
        hdn = jnp.maximum(
            jnp.dot(x1, w1, preferred_element_type=jnp.float32) + b1, 0.0)
        ffn = jnp.dot(hdn, w2, preferred_element_type=jnp.float32) + b2

        # --- residual + LayerNorm 2 -----------------------------------------
        x = _layer_norm(x1 + ffn, ln2w, ln2b)

    # --- final Linear(E, 1): VPU multiply + lane reduce, lane-dense store ---
    res = jnp.sum(x * lin_w_ref[...], axis=-1, keepdims=True) + lin_b_ref[...]
    o_ref[...] = jnp.broadcast_to(res, (S, OUT_PAD))


def _vmem_spec():
    return pl.BlockSpec(memory_space=pltpu.MemorySpace.VMEM)


def fused_forward(prev, params):
    args = (prev, params["wqkv"], params["bqkv"], params["wo"], params["w1"],
            params["b1"], params["w2"], params["vecE"],
            params["lin_w"], params["lin_b"])
    out = pl.pallas_call(
        fused_forward_kernel,
        out_shape=jax.ShapeDtypeStruct((S, OUT_PAD), jnp.float32),
        in_specs=[_vmem_spec() for _ in args],
        out_specs=_vmem_spec(),
    )(*args)
    return out[:, :1]                                   # (S, 1)


def init_params(key):
    """Deterministic synthetic weights with PyTorch-native shapes, then
    pre-transposed / stacked for the fused kernel (x @ W layout)."""
    def randn(k, shape, scale=0.05):
        return jax.random.normal(k, shape, jnp.float32) * scale

    wqkv_l, bqkv_l, wo_l, w1_l, b1_l, w2_l, vecE_l = [], [], [], [], [], [], []
    for l in range(N_LAYERS):
        ks = jax.random.split(jax.random.fold_in(key, l), 10)
        in_proj_w = randn(ks[0], (3 * E, E))    # nn.MultiheadAttention.in_proj_weight
        in_proj_b = randn(ks[1], (3 * E,))
        wo = randn(ks[2], (E, E))               # out_proj.weight (out, in)
        bo = randn(ks[3], (E,))
        w1 = randn(ks[4], (F, E))               # linear1.weight (out, in)
        b1 = randn(ks[5], (F,))
        w2 = randn(ks[6], (E, F))               # linear2.weight (out, in)
        b2 = randn(ks[7], (E,))
        ln1w = jnp.ones((E,), jnp.float32); ln1b = jnp.zeros((E,), jnp.float32)
        ln2w = jnp.ones((E,), jnp.float32); ln2b = jnp.zeros((E,), jnp.float32)

        wqkv_l.append(in_proj_w.T)                       # (E, 3E), cols = [q|k|v]
        bqkv_l.append(in_proj_b.reshape(1, 3 * E))       # (1, 3E)
        wo_l.append(wo.T)                                # (E, E)
        w1_l.append(w1.T)                                # (E, F)
        b1_l.append(b1.reshape(1, F))                    # (1, F)
        w2_l.append(w2.T)                                # (F, E)
        vecE_l.append(jnp.stack([bo, ln1w, ln1b, b2, ln2w, ln2b]))  # (6, E)

    k_lin = jax.random.fold_in(key, 1000)
    lin_w = randn(k_lin, (1, E))                         # nn.Linear(E, 1).weight
    lin_b = randn(jax.random.fold_in(key, 1001), (1,))
    return {
        "wqkv": jnp.stack(wqkv_l),                       # (L, E, 3E)
        "bqkv": jnp.stack(bqkv_l),                       # (L, 1, 3E)
        "wo":   jnp.stack(wo_l),                         # (L, E, E)
        "w1":   jnp.stack(w1_l),                         # (L, E, F)
        "b1":   jnp.stack(b1_l),                         # (L, 1, F)
        "w2":   jnp.stack(w2_l),                         # (L, F, E)
        "vecE": jnp.stack(vecE_l),                       # (L, 6, E)
        "lin_w": lin_w,                                  # (1, E) row
        "lin_b": lin_b.reshape(1, 1),                    # (1, 1)
    }


@jax.jit
def youtube_predictor_forward(previous_video_feats, params):
    # TODO(synk): CLIP ViT-L/14 encode_image / encode_text is a pretrained
    # backbone whose result is overwritten (dead) in the original forward, so
    # it is not reproduced here.
    return fused_forward(previous_video_feats.astype(jnp.float32), params)


if __name__ == "__main__":
    key = jax.random.PRNGKey(0)
    k_feat, k_param = jax.random.split(key)
    previous_video_feats = jax.random.normal(k_feat, (S, E_HALF), jnp.float32)
    params = init_params(k_param)

    out = youtube_predictor_forward(previous_video_feats, params)
    out = jax.block_until_ready(out)
    assert out.shape == (S, 1) and out.dtype == jnp.float32
    print("KERNEL_OK")
</pallas_src>

<mosaic_0001>
module attributes {stable_mosaic.version = 11 : i64} {
  func.func @fused_forward_kernel(%arg0: memref<8x16xf32, #tpu.memory_space<vmem>>, %arg1: memref<2x32x96xf32, #tpu.memory_space<vmem>>, %arg2: memref<2x1x96xf32, #tpu.memory_space<vmem>>, %arg3: memref<2x32x32xf32, #tpu.memory_space<vmem>>, %arg4: memref<2x32x64xf32, #tpu.memory_space<vmem>>, %arg5: memref<2x1x64xf32, #tpu.memory_space<vmem>>, %arg6: memref<2x64x32xf32, #tpu.memory_space<vmem>>, %arg7: memref<2x6x32xf32, #tpu.memory_space<vmem>>, %arg8: memref<1x32xf32, #tpu.memory_space<vmem>>, %arg9: memref<1x1xf32, #tpu.memory_space<vmem>>, %arg10: memref<8x128xf32, #tpu.memory_space<vmem>>) attributes {dimension_semantics = [], scalar_prefetch = 0 : i64, scratch_operands = 0 : i64, tpu.core_type = #tpu.core_type<tc>} {
    %c0 = arith.constant 0 : index
    %c0_0 = arith.constant 0 : index
    %0 = vector.load %arg0[%c0, %c0_0] : memref<8x16xf32, #tpu.memory_space<vmem>>, vector<8x16xf32>
    %1 = tpu.concatenate %0, %0 in 1 : vector<8x16xf32>, vector<8x16xf32> -> vector<8x32xf32>
    %cst = arith.constant 8.000000e+00 : f32
    %2 = math.sqrt %cst : f32
    %cst_1 = arith.constant 1.000000e+00 : f32
    %3 = arith.divf %cst_1, %2 : f32
    %c0_2 = arith.constant 0 : index
    %c0_3 = arith.constant 0 : index
    %c0_4 = arith.constant 0 : index
    %4 = vector.load %arg1[%c0_2, %c0_3, %c0_4] : memref<2x32x96xf32, #tpu.memory_space<vmem>>, vector<1x32x96xf32>
    %5 = vector.shape_cast %4 : vector<1x32x96xf32> to vector<32x96xf32>
    %c0_5 = arith.constant 0 : index
    %c0_6 = arith.constant 0 : index
    %c0_7 = arith.constant 0 : index
    %6 = vector.load %arg2[%c0_5, %c0_6, %c0_7] : memref<2x1x96xf32, #tpu.memory_space<vmem>>, vector<1x1x96xf32>
    %7 = vector.shape_cast %6 : vector<1x1x96xf32> to vector<1x96xf32>
    %c0_8 = arith.constant 0 : index
    %c0_9 = arith.constant 0 : index
    %c0_10 = arith.constant 0 : index
    %8 = vector.load %arg3[%c0_8, %c0_9, %c0_10] : memref<2x32x32xf32, #tpu.memory_space<vmem>>, vector<1x32x32xf32>
    %9 = vector.shape_cast %8 : vector<1x32x32xf32> to vector<32x32xf32>
    %c0_11 = arith.constant 0 : index
    %c0_12 = arith.constant 0 : index
    %c0_13 = arith.constant 0 : index
    %10 = vector.load %arg4[%c0_11, %c0_12, %c0_13] : memref<2x32x64xf32, #tpu.memory_space<vmem>>, vector<1x32x64xf32>
    %11 = vector.shape_cast %10 : vector<1x32x64xf32> to vector<32x64xf32>
    %c0_14 = arith.constant 0 : index
    %c0_15 = arith.constant 0 : index
    %c0_16 = arith.constant 0 : index
    %12 = vector.load %arg5[%c0_14, %c0_15, %c0_16] : memref<2x1x64xf32, #tpu.memory_space<vmem>>, vector<1x1x64xf32>
    %13 = vector.shape_cast %12 : vector<1x1x64xf32> to vector<1x64xf32>
    %c0_17 = arith.constant 0 : index
    %c0_18 = arith.constant 0 : index
    %c0_19 = arith.constant 0 : index
    %14 = vector.load %arg6[%c0_17, %c0_18, %c0_19] : memref<2x64x32xf32, #tpu.memory_space<vmem>>, vector<1x64x32xf32>
    %15 = vector.shape_cast %14 : vector<1x64x32xf32> to vector<64x32xf32>
    %c0_20 = arith.constant 0 : index
    %c0_21 = arith.constant 0 : index
    %c0_22 = arith.constant 0 : index
    %16 = vector.load %arg7[%c0_20, %c0_21, %c0_22] : memref<2x6x32xf32, #tpu.memory_space<vmem>>, vector<1x6x32xf32>
    %17 = vector.shape_cast %16 : vector<1x6x32xf32> to vector<6x32xf32>
    %18 = vector.extract_strided_slice %17 {offsets = [0, 0], sizes = [1, 32], strides = [1, 1]} : vector<6x32xf32> to vector<1x32xf32>
    %19 = vector.extract_strided_slice %17 {offsets = [1, 0], sizes = [1, 32], strides = [1, 1]} : vector<6x32xf32> to vector<1x32xf32>
    %20 = vector.extract_strided_slice %17 {offsets = [2, 0], sizes = [1, 32], strides = [1, 1]} : vector<6x32xf32> to vector<1x32xf32>
    %21 = vector.extract_strided_slice %17 {offsets = [3, 0], sizes = [1, 32], strides = [1, 1]} : vector<6x32xf32> to vector<1x32xf32>
    %22 = vector.extract_strided_slice %17 {offsets = [4, 0], sizes = [1, 32], strides = [1, 1]} : vector<6x32xf32> to vector<1x32xf32>
    %23 = vector.extract_strided_slice %17 {offsets = [5, 0], sizes = [1, 32], strides = [1, 1]} : vector<6x32xf32> to vector<1x32xf32>
    %cst_23 = arith.constant dense<0.000000e+00> : vector<8x96xf32>
    %24 = tpu.matmul %1, %5, %cst_23 {dimension_numbers = #tpu.dot_dimension_numbers<[1], [0], [0], [1], [0, 0, 1, 1], [], []>} : vector<8x32xf32>, vector<32x96xf32>, vector<8x96xf32> -> vector<8x96xf32>
    %25 = vector.broadcast %7 : vector<1x96xf32> to vector<8x96xf32>
    %26 = arith.addf %24, %25 : vector<8x96xf32>
    %27 = vector.extract_strided_slice %26 {offsets = [0, 0], sizes = [8, 32], strides = [1, 1]} : vector<8x96xf32> to vector<8x32xf32>
    %28 = vector.extract_strided_slice %26 {offsets = [0, 32], sizes = [8, 32], strides = [1, 1]} : vector<8x96xf32> to vector<8x32xf32>
    %29 = vector.extract_strided_slice %26 {offsets = [0, 64], sizes = [8, 32], strides = [1, 1]} : vector<8x96xf32> to vector<8x32xf32>
    %30 = vector.extract_strided_slice %27 {offsets = [0, 0], sizes = [8, 8], strides = [1, 1]} : vector<8x32xf32> to vector<8x8xf32>
    %31 = vector.extract_strided_slice %28 {offsets = [0, 0], sizes = [8, 8], strides = [1, 1]} : vector<8x32xf32> to vector<8x8xf32>
    %32 = vector.extract_strided_slice %29 {offsets = [0, 0], sizes = [8, 8], strides = [1, 1]} : vector<8x32xf32> to vector<8x8xf32>
    %cst_24 = arith.constant dense<0.000000e+00> : vector<8x8xf32>
    %33 = tpu.matmul %30, %31, %cst_24 {dimension_numbers = #tpu.dot_dimension_numbers<[1], [1], [0], [0], [0, 0, 1, 0], [], []>} : vector<8x8xf32>, vector<8x8xf32>, vector<8x8xf32> -> vector<8x8xf32>
    %34 = vector.broadcast %3 : f32 to vector<8x8xf32>
    %35 = arith.mulf %33, %34 : vector<8x8xf32>
    %cst_25 = arith.constant dense<0xFF800000> : vector<8xf32>
    %36 = vector.multi_reduction <maximumf>, %35, %cst_25 [1] : vector<8x8xf32> to vector<8xf32>
    %37 = vector.shape_cast %36 : vector<8xf32> to vector<8x1xf32>
    %38 = vector.broadcast %37 : vector<8x1xf32> to vector<8x8xf32>
    %39 = arith.subf %35, %38 : vector<8x8xf32>
    %40 = math.exp %39 : vector<8x8xf32>
    %cst_26 = arith.constant dense<0.000000e+00> : vector<8xf32>
    %41 = vector.multi_reduction <add>, %40, %cst_26 [1] : vector<8x8xf32> to vector<8xf32>
    %42 = vector.shape_cast %41 : vector<8xf32> to vector<8x1xf32>
    %43 = tpu.reciprocal %42 {approx = true} : vector<8x1xf32> -> vector<8x1xf32>
    %44 = vector.broadcast %43 : vector<8x1xf32> to vector<8x8xf32>
    %45 = arith.mulf %40, %44 : vector<8x8xf32>
    %cst_27 = arith.constant dense<0.000000e+00> : vector<8x8xf32>
    %46 = tpu.matmul %45, %32, %cst_27 {dimension_numbers = #tpu.dot_dimension_numbers<[1], [0], [0], [1], [0, 0, 1, 1], [], []>} : vector<8x8xf32>, vector<8x8xf32>, vector<8x8xf32> -> vector<8x8xf32>
    %47 = vector.extract_strided_slice %27 {offsets = [0, 8], sizes = [8, 8], strides = [1, 1]} : vector<8x32xf32> to vector<8x8xf32>
    %48 = vector.extract_strided_slice %28 {offsets = [0, 8], sizes = [8, 8], strides = [1, 1]} : vector<8x32xf32> to vector<8x8xf32>
    %49 = vector.extract_strided_slice %29 {offsets = [0, 8], sizes = [8, 8], strides = [1, 1]} : vector<8x32xf32> to vector<8x8xf32>
    %cst_28 = arith.constant dense<0.000000e+00> : vector<8x8xf32>
    %50 = tpu.matmul %47, %48, %cst_28 {dimension_numbers = #tpu.dot_dimension_numbers<[1], [1], [0], [0], [0, 0, 1, 0], [], []>} : vector<8x8xf32>, vector<8x8xf32>, vector<8x8xf32> -> vector<8x8xf32>
    %51 = vector.broadcast %3 : f32 to vector<8x8xf32>
    %52 = arith.mulf %50, %51 : vector<8x8xf32>
    %cst_29 = arith.constant dense<0xFF800000> : vector<8xf32>
    %53 = vector.multi_reduction <maximumf>, %52, %cst_29 [1] : vector<8x8xf32> to vector<8xf32>
    %54 = vector.shape_cast %53 : vector<8xf32> to vector<8x1xf32>
    %55 = vector.broadcast %54 : vector<8x1xf32> to vector<8x8xf32>
    %56 = arith.subf %52, %55 : vector<8x8xf32>
    %57 = math.exp %56 : vector<8x8xf32>
    %cst_30 = arith.constant dense<0.000000e+00> : vector<8xf32>
    %58 = vector.multi_reduction <add>, %57, %cst_30 [1] : vector<8x8xf32> to vector<8xf32>
    %59 = vector.shape_cast %58 : vector<8xf32> to vector<8x1xf32>
    %60 = tpu.reciprocal %59 {approx = true} : vector<8x1xf32> -> vector<8x1xf32>
    %61 = vector.broadcast %60 : vector<8x1xf32> to vector<8x8xf32>
    %62 = arith.mulf %57, %61 : vector<8x8xf32>
    %cst_31 = arith.constant dense<0.000000e+00> : vector<8x8xf32>
    %63 = tpu.matmul %62, %49, %cst_31 {dimension_numbers = #tpu.dot_dimension_numbers<[1], [0], [0], [1], [0, 0, 1, 1], [], []>} : vector<8x8xf32>, vector<8x8xf32>, vector<8x8xf32> -> vector<8x8xf32>
    %64 = vector.extract_strided_slice %27 {offsets = [0, 16], sizes = [8, 8], strides = [1, 1]} : vector<8x32xf32> to vector<8x8xf32>
    %65 = vector.extract_strided_slice %28 {offsets = [0, 16], sizes = [8, 8], strides = [1, 1]} : vector<8x32xf32> to vector<8x8xf32>
    %66 = vector.extract_strided_slice %29 {offsets = [0, 16], sizes = [8, 8], strides = [1, 1]} : vector<8x32xf32> to vector<8x8xf32>
    %cst_32 = arith.constant dense<0.000000e+00> : vector<8x8xf32>
    %67 = tpu.matmul %64, %65, %cst_32 {dimension_numbers = #tpu.dot_dimension_numbers<[1], [1], [0], [0], [0, 0, 1, 0], [], []>} : vector<8x8xf32>, vector<8x8xf32>, vector<8x8xf32> -> vector<8x8xf32>
    %68 = vector.broadcast %3 : f32 to vector<8x8xf32>
    %69 = arith.mulf %67, %68 : vector<8x8xf32>
    %cst_33 = arith.constant dense<0xFF800000> : vector<8xf32>
    %70 = vector.multi_reduction <maximumf>, %69, %cst_33 [1] : vector<8x8xf32> to vector<8xf32>
    %71 = vector.shape_cast %70 : vector<8xf32> to vector<8x1xf32>
    %72 = vector.broadcast %71 : vector<8x1xf32> to vector<8x8xf32>
    %73 = arith.subf %69, %72 : vector<8x8xf32>
    %74 = math.exp %73 : vector<8x8xf32>
    %cst_34 = arith.constant dense<0.000000e+00> : vector<8xf32>
    %75 = vector.multi_reduction <add>, %74, %cst_34 [1] : vector<8x8xf32> to vector<8xf32>
    %76 = vector.shape_cast %75 : vector<8xf32> to vector<8x1xf32>
    %77 = tpu.reciprocal %76 {approx = true} : vector<8x1xf32> -> vector<8x1xf32>
    %78 = vector.broadcast %77 : vector<8x1xf32> to vector<8x8xf32>
    %79 = arith.mulf %74, %78 : vector<8x8xf32>
    %cst_35 = arith.constant dense<0.000000e+00> : vector<8x8xf32>
    %80 = tpu.matmul %79, %66, %cst_35 {dimension_numbers = #tpu.dot_dimension_numbers<[1], [0], [0], [1], [0, 0, 1, 1], [], []>} : vector<8x8xf32>, vector<8x8xf32>, vector<8x8xf32> -> vector<8x8xf32>
    %81 = vector.extract_strided_slice %27 {offsets = [0, 24], sizes = [8, 8], strides = [1, 1]} : vector<8x32xf32> to vector<8x8xf32>
    %82 = vector.extract_strided_slice %28 {offsets = [0, 24], sizes = [8, 8], strides = [1, 1]} : vector<8x32xf32> to vector<8x8xf32>
    %83 = vector.extract_strided_slice %29 {offsets = [0, 24], sizes = [8, 8], strides = [1, 1]} : vector<8x32xf32> to vector<8x8xf32>
    %cst_36 = arith.constant dense<0.000000e+00> : vector<8x8xf32>
    %84 = tpu.matmul %81, %82, %cst_36 {dimension_numbers = #tpu.dot_dimension_numbers<[1], [1], [0], [0], [0, 0, 1, 0], [], []>} : vector<8x8xf32>, vector<8x8xf32>, vector<8x8xf32> -> vector<8x8xf32>
    %85 = vector.broadcast %3 : f32 to vector<8x8xf32>
    %86 = arith.mulf %84, %85 : vector<8x8xf32>
    %cst_37 = arith.constant dense<0xFF800000> : vector<8xf32>
    %87 = vector.multi_reduction <maximumf>, %86, %cst_37 [1] : vector<8x8xf32> to vector<8xf32>
    %88 = vector.shape_cast %87 : vector<8xf32> to vector<8x1xf32>
    %89 = vector.broadcast %88 : vector<8x1xf32> to vector<8x8xf32>
    %90 = arith.subf %86, %89 : vector<8x8xf32>
    %91 = math.exp %90 : vector<8x8xf32>
    %cst_38 = arith.constant dense<0.000000e+00> : vector<8xf32>
    %92 = vector.multi_reduction <add>, %91, %cst_38 [1] : vector<8x8xf32> to vector<8xf32>
    %93 = vector.shape_cast %92 : vector<8xf32> to vector<8x1xf32>
    %94 = tpu.reciprocal %93 {approx = true} : vector<8x1xf32> -> vector<8x1xf32>
    %95 = vector.broadcast %94 : vector<8x1xf32> to vector<8x8xf32>
    %96 = arith.mulf %91, %95 : vector<8x8xf32>
    %cst_39 = arith.constant dense<0.000000e+00> : vector<8x8xf32>
    %97 = tpu.matmul %96, %83, %cst_39 {dimension_numbers = #tpu.dot_dimension_numbers<[1], [0], [0], [1], [0, 0, 1, 1], [], []>} : vector<8x8xf32>, vector<8x8xf32>, vector<8x8xf32> -> vector<8x8xf32>
    %98 = tpu.concatenate %46, %63, %80, %97 in 1 : vector<8x8xf32>, vector<8x8xf32>, vector<8x8xf32>, vector<8x8xf32> -> vector<8x32xf32>
    %cst_40 = arith.constant dense<0.000000e+00> : vector<8x32xf32>
    %99 = tpu.matmul %98, %9, %cst_40 {dimension_numbers = #tpu.dot_dimension_numbers<[1], [0], [0], [1], [0, 0, 1, 1], [], []>} : vector<8x32xf32>, vector<32x32xf32>, vector<8x32xf32> -> vector<8x32xf32>
    %100 = vector.broadcast %18 : vector<1x32xf32> to vector<8x32xf32>
    %101 = arith.addf %99, %100 : vector<8x32xf32>
    %102 = arith.addf %1, %101 : vector<8x32xf32>
    %cst_41 = arith.constant dense<0.000000e+00> : vector<8xf32>
    %103 = vector.multi_reduction <add>, %102, %cst_41 [1] : vector<8x32xf32> to vector<8xf32>
    %104 = vector.shape_cast %103 : vector<8xf32> to vector<8x1xf32>
    %cst_42 = arith.constant 3.200000e+01 : f32
    %105 = vector.broadcast %cst_42 : f32 to vector<8x1xf32>
    %106 = arith.divf %104, %105 : vector<8x1xf32>
    %107 = vector.broadcast %106 : vector<8x1xf32> to vector<8x32xf32>
    %108 = arith.subf %102, %107 : vector<8x32xf32>
    %109 = arith.mulf %108, %108 : vector<8x32xf32>
    %cst_43 = arith.constant dense<0.000000e+00> : vector<8xf32>
    %110 = vector.multi_reduction <add>, %109, %cst_43 [1] : vector<8x32xf32> to vector<8xf32>
    %111 = vector.shape_cast %110 : vector<8xf32> to vector<8x1xf32>
    %cst_44 = arith.constant 3.200000e+01 : f32
    %112 = vector.broadcast %cst_44 : f32 to vector<8x1xf32>
    %113 = arith.divf %111, %112 : vector<8x1xf32>
    %114 = vector.broadcast %106 : vector<8x1xf32> to vector<8x32xf32>
    %115 = arith.subf %102, %114 : vector<8x32xf32>
    %cst_45 = arith.constant 9.99999974E-6 : f32
    %116 = vector.broadcast %cst_45 : f32 to vector<8x1xf32>
    %117 = arith.addf %113, %116 : vector<8x1xf32>
    %118 = math.rsqrt %117 : vector<8x1xf32>
    %119 = vector.broadcast %118 : vector<8x1xf32> to vector<8x32xf32>
    %120 = arith.mulf %115, %119 : vector<8x32xf32>
    %121 = vector.broadcast %19 : vector<1x32xf32> to vector<8x32xf32>
    %122 = arith.mulf %120, %121 : vector<8x32xf32>
    %123 = vector.broadcast %20 : vector<1x32xf32> to vector<8x32xf32>
    %124 = arith.addf %122, %123 : vector<8x32xf32>
    %cst_46 = arith.constant dense<0.000000e+00> : vector<8x64xf32>
    %125 = tpu.matmul %124, %11, %cst_46 {dimension_numbers = #tpu.dot_dimension_numbers<[1], [0], [0], [1], [0, 0, 1, 1], [], []>} : vector<8x32xf32>, vector<32x64xf32>, vector<8x64xf32> -> vector<8x64xf32>
    %126 = vector.broadcast %13 : vector<1x64xf32> to vector<8x64xf32>
    %127 = arith.addf %125, %126 : vector<8x64xf32>
    %cst_47 = arith.constant 0.000000e+00 : f32
    %128 = vector.broadcast %cst_47 : f32 to vector<8x64xf32>
    %129 = arith.maximumf %127, %128 : vector<8x64xf32>
    %cst_48 = arith.constant dense<0.000000e+00> : vector<8x32xf32>
    %130 = tpu.matmul %129, %15, %cst_48 {dimension_numbers = #tpu.dot_dimension_numbers<[1], [0], [0], [1], [0, 0, 1, 1], [], []>} : vector<8x64xf32>, vector<64x32xf32>, vector<8x32xf32> -> vector<8x32xf32>
    %131 = vector.broadcast %21 : vector<1x32xf32> to vector<8x32xf32>
    %132 = arith.addf %130, %131 : vector<8x32xf32>
    %133 = arith.addf %124, %132 : vector<8x32xf32>
    %cst_49 = arith.constant dense<0.000000e+00> : vector<8xf32>
    %134 = vector.multi_reduction <add>, %133, %cst_49 [1] : vector<8x32xf32> to vector<8xf32>
    %135 = vector.shape_cast %134 : vector<8xf32> to vector<8x1xf32>
    %cst_50 = arith.constant 3.200000e+01 : f32
    %136 = vector.broadcast %cst_50 : f32 to vector<8x1xf32>
    %137 = arith.divf %135, %136 : vector<8x1xf32>
    %138 = vector.broadcast %137 : vector<8x1xf32> to vector<8x32xf32>
    %139 = arith.subf %133, %138 : vector<8x32xf32>
    %140 = arith.mulf %139, %139 : vector<8x32xf32>
    %cst_51 = arith.constant dense<0.000000e+00> : vector<8xf32>
    %141 = vector.multi_reduction <add>, %140, %cst_51 [1] : vector<8x32xf32> to vector<8xf32>
    %142 = vector.shape_cast %141 : vector<8xf32> to vector<8x1xf32>
    %cst_52 = arith.constant 3.200000e+01 : f32
    %143 = vector.broadcast %cst_52 : f32 to vector<8x1xf32>
    %144 = arith.divf %142, %143 : vector<8x1xf32>
    %145 = vector.broadcast %137 : vector<8x1xf32> to vector<8x32xf32>
    %146 = arith.subf %133, %145 : vector<8x32xf32>
    %cst_53 = arith.constant 9.99999974E-6 : f32
    %147 = vector.broadcast %cst_53 : f32 to vector<8x1xf32>
    %148 = arith.addf %144, %147 : vector<8x1xf32>
    %149 = math.rsqrt %148 : vector<8x1xf32>
    %150 = vector.broadcast %149 : vector<8x1xf32> to vector<8x32xf32>
    %151 = arith.mulf %146, %150 : vector<8x32xf32>
    %152 = vector.broadcast %22 : vector<1x32xf32> to vector<8x32xf32>
    %153 = arith.mulf %151, %152 : vector<8x32xf32>
    %154 = vector.broadcast %23 : vector<1x32xf32> to vector<8x32xf32>
    %155 = arith.addf %153, %154 : vector<8x32xf32>
    %c1 = arith.constant 1 : index
    %c0_54 = arith.constant 0 : index
    %c0_55 = arith.constant 0 : index
    %156 = vector.load %arg1[%c1, %c0_54, %c0_55] : memref<2x32x96xf32, #tpu.memory_space<vmem>>, vector<1x32x96xf32>
    %157 = vector.shape_cast %156 : vector<1x32x96xf32> to vector<32x96xf32>
    %c1_56 = arith.constant 1 : index
    %c0_57 = arith.constant 0 : index
    %c0_58 = arith.constant 0 : index
    %158 = vector.load %arg2[%c1_56, %c0_57, %c0_58] : memref<2x1x96xf32, #tpu.memory_space<vmem>>, vector<1x1x96xf32>
    %159 = vector.shape_cast %158 : vector<1x1x96xf32> to vector<1x96xf32>
    %c1_59 = arith.constant 1 : index
    %c0_60 = arith.constant 0 : index
    %c0_61 = arith.constant 0 : index
    %160 = vector.load %arg3[%c1_59, %c0_60, %c0_61] : memref<2x32x32xf32, #tpu.memory_space<vmem>>, vector<1x32x32xf32>
    %161 = vector.shape_cast %160 : vector<1x32x32xf32> to vector<32x32xf32>
    %c1_62 = arith.constant 1 : index
    %c0_63 = arith.constant 0 : index
    %c0_64 = arith.constant 0 : index
    %162 = vector.load %arg4[%c1_62, %c0_63, %c0_64] : memref<2x32x64xf32, #tpu.memory_space<vmem>>, vector<1x32x64xf32>
    %163 = vector.shape_cast %162 : vector<1x32x64xf32> to vector<32x64xf32>
    %c1_65 = arith.constant 1 : index
    %c0_66 = arith.constant 0 : index
    %c0_67 = arith.constant 0 : index
    %164 = vector.load %arg5[%c1_65, %c0_66, %c0_67] : memref<2x1x64xf32, #tpu.memory_space<vmem>>, vector<1x1x64xf32>
    %165 = vector.shape_cast %164 : vector<1x1x64xf32> to vector<1x64xf32>
    %c1_68 = arith.constant 1 : index
    %c0_69 = arith.constant 0 : index
    %c0_70 = arith.constant 0 : index
    %166 = vector.load %arg6[%c1_68, %c0_69, %c0_70] : memref<2x64x32xf32, #tpu.memory_space<vmem>>, vector<1x64x32xf32>
    %167 = vector.shape_cast %166 : vector<1x64x32xf32> to vector<64x32xf32>
    %c1_71 = arith.constant 1 : index
    %c0_72 = arith.constant 0 : index
    %c0_73 = arith.constant 0 : index
    %168 = vector.load %arg7[%c1_71, %c0_72, %c0_73] : memref<2x6x32xf32, #tpu.memory_space<vmem>>, vector<1x6x32xf32>
    %169 = vector.shape_cast %168 : vector<1x6x32xf32> to vector<6x32xf32>
    %170 = vector.extract_strided_slice %169 {offsets = [0, 0], sizes = [1, 32], strides = [1, 1]} : vector<6x32xf32> to vector<1x32xf32>
    %171 = vector.extract_strided_slice %169 {offsets = [1, 0], sizes = [1, 32], strides = [1, 1]} : vector<6x32xf32> to vector<1x32xf32>
    %172 = vector.extract_strided_slice %169 {offsets = [2, 0], sizes = [1, 32], strides = [1, 1]} : vector<6x32xf32> to vector<1x32xf32>
    %173 = vector.extract_strided_slice %169 {offsets = [3, 0], sizes = [1, 32], strides = [1, 1]} : vector<6x32xf32> to vector<1x32xf32>
    %174 = vector.extract_strided_slice %169 {offsets = [4, 0], sizes = [1, 32], strides = [1, 1]} : vector<6x32xf32> to vector<1x32xf32>
    %175 = vector.extract_strided_slice %169 {offsets = [5, 0], sizes = [1, 32], strides = [1, 1]} : vector<6x32xf32> to vector<1x32xf32>
    %cst_74 = arith.constant dense<0.000000e+00> : vector<8x96xf32>
    %176 = tpu.matmul %155, %157, %cst_74 {dimension_numbers = #tpu.dot_dimension_numbers<[1], [0], [0], [1], [0, 0, 1, 1], [], []>} : vector<8x32xf32>, vector<32x96xf32>, vector<8x96xf32> -> vector<8x96xf32>
    %177 = vector.broadcast %159 : vector<1x96xf32> to vector<8x96xf32>
    %178 = arith.addf %176, %177 : vector<8x96xf32>
    %179 = vector.extract_strided_slice %178 {offsets = [0, 0], sizes = [8, 32], strides = [1, 1]} : vector<8x96xf32> to vector<8x32xf32>
    %180 = vector.extract_strided_slice %178 {offsets = [0, 32], sizes = [8, 32], strides = [1, 1]} : vector<8x96xf32> to vector<8x32xf32>
    %181 = vector.extract_strided_slice %178 {offsets = [0, 64], sizes = [8, 32], strides = [1, 1]} : vector<8x96xf32> to vector<8x32xf32>
    %182 = vector.extract_strided_slice %179 {offsets = [0, 0], sizes = [8, 8], strides = [1, 1]} : vector<8x32xf32> to vector<8x8xf32>
    %183 = vector.extract_strided_slice %180 {offsets = [0, 0], sizes = [8, 8], strides = [1, 1]} : vector<8x32xf32> to vector<8x8xf32>
    %184 = vector.extract_strided_slice %181 {offsets = [0, 0], sizes = [8, 8], strides = [1, 1]} : vector<8x32xf32> to vector<8x8xf32>
    %cst_75 = arith.constant dense<0.000000e+00> : vector<8x8xf32>
    %185 = tpu.matmul %182, %183, %cst_75 {dimension_numbers = #tpu.dot_dimension_numbers<[1], [1], [0], [0], [0, 0, 1, 0], [], []>} : vector<8x8xf32>, vector<8x8xf32>, vector<8x8xf32> -> vector<8x8xf32>
    %186 = vector.broadcast %3 : f32 to vector<8x8xf32>
    %187 = arith.mulf %185, %186 : vector<8x8xf32>
    %cst_76 = arith.constant dense<0xFF800000> : vector<8xf32>
    %188 = vector.multi_reduction <maximumf>, %187, %cst_76 [1] : vector<8x8xf32> to vector<8xf32>
    %189 = vector.shape_cast %188 : vector<8xf32> to vector<8x1xf32>
    %190 = vector.broadcast %189 : vector<8x1xf32> to vector<8x8xf32>
    %191 = arith.subf %187, %190 : vector<8x8xf32>
    %192 = math.exp %191 : vector<8x8xf32>
    %cst_77 = arith.constant dense<0.000000e+00> : vector<8xf32>
    %193 = vector.multi_reduction <add>, %192, %cst_77 [1] : vector<8x8xf32> to vector<8xf32>
    %194 = vector.shape_cast %193 : vector<8xf32> to vector<8x1xf32>
    %195 = tpu.reciprocal %194 {approx = true} : vector<8x1xf32> -> vector<8x1xf32>
    %196 = vector.broadcast %195 : vector<8x1xf32> to vector<8x8xf32>
    %197 = arith.mulf %192, %196 : vector<8x8xf32>
    %cst_78 = arith.constant dense<0.000000e+00> : vector<8x8xf32>
    %198 = tpu.matmul %197, %184, %cst_78 {dimension_numbers = #tpu.dot_dimension_numbers<[1], [0], [0], [1], [0, 0, 1, 1], [], []>} : vector<8x8xf32>, vector<8x8xf32>, vector<8x8xf32> -> vector<8x8xf32>
    %199 = vector.extract_strided_slice %179 {offsets = [0, 8], sizes = [8, 8], strides = [1, 1]} : vector<8x32xf32> to vector<8x8xf32>
    %200 = vector.extract_strided_slice %180 {offsets = [0, 8], sizes = [8, 8], strides = [1, 1]} : vector<8x32xf32> to vector<8x8xf32>
    %201 = vector.extract_strided_slice %181 {offsets = [0, 8], sizes = [8, 8], strides = [1, 1]} : vector<8x32xf32> to vector<8x8xf32>
    %cst_79 = arith.constant dense<0.000000e+00> : vector<8x8xf32>
    %202 = tpu.matmul %199, %200, %cst_79 {dimension_numbers = #tpu.dot_dimension_numbers<[1], [1], [0], [0], [0, 0, 1, 0], [], []>} : vector<8x8xf32>, vector<8x8xf32>, vector<8x8xf32> -> vector<8x8xf32>
    %203 = vector.broadcast %3 : f32 to vector<8x8xf32>
    %204 = arith.mulf %202, %203 : vector<8x8xf32>
    %cst_80 = arith.constant dense<0xFF800000> : vector<8xf32>
    %205 = vector.multi_reduction <maximumf>, %204, %cst_80 [1] : vector<8x8xf32> to vector<8xf32>
    %206 = vector.shape_cast %205 : vector<8xf32> to vector<8x1xf32>
    %207 = vector.broadcast %206 : vector<8x1xf32> to vector<8x8xf32>
    %208 = arith.subf %204, %207 : vector<8x8xf32>
    %209 = math.exp %208 : vector<8x8xf32>
    %cst_81 = arith.constant dense<0.000000e+00> : vector<8xf32>
    %210 = vector.multi_reduction <add>, %209, %cst_81 [1] : vector<8x8xf32> to vector<8xf32>
    %211 = vector.shape_cast %210 : vector<8xf32> to vector<8x1xf32>
    %212 = tpu.reciprocal %211 {approx = true} : vector<8x1xf32> -> vector<8x1xf32>
    %213 = vector.broadcast %212 : vector<8x1xf32> to vector<8x8xf32>
    %214 = arith.mulf %209, %213 : vector<8x8xf32>
    %cst_82 = arith.constant dense<0.000000e+00> : vector<8x8xf32>
    %215 = tpu.matmul %214, %201, %cst_82 {dimension_numbers = #tpu.dot_dimension_numbers<[1], [0], [0], [1], [0, 0, 1, 1], [], []>} : vector<8x8xf32>, vector<8x8xf32>, vector<8x8xf32> -> vector<8x8xf32>
    %216 = vector.extract_strided_slice %179 {offsets = [0, 16], sizes = [8, 8], strides = [1, 1]} : vector<8x32xf32> to vector<8x8xf32>
    %217 = vector.extract_strided_slice %180 {offsets = [0, 16], sizes = [8, 8], strides = [1, 1]} : vector<8x32xf32> to vector<8x8xf32>
    %218 = vector.extract_strided_slice %181 {offsets = [0, 16], sizes = [8, 8], strides = [1, 1]} : vector<8x32xf32> to vector<8x8xf32>
    %cst_83 = arith.constant dense<0.000000e+00> : vector<8x8xf32>
    %219 = tpu.matmul %216, %217, %cst_83 {dimension_numbers = #tpu.dot_dimension_numbers<[1], [1], [0], [0], [0, 0, 1, 0], [], []>} : vector<8x8xf32>, vector<8x8xf32>, vector<8x8xf32> -> vector<8x8xf32>
    %220 = vector.broadcast %3 : f32 to vector<8x8xf32>
    %221 = arith.mulf %219, %220 : vector<8x8xf32>
    %cst_84 = arith.constant dense<0xFF800000> : vector<8xf32>
    %222 = vector.multi_reduction <maximumf>, %221, %cst_84 [1] : vector<8x8xf32> to vector<8xf32>
    %223 = vector.shape_cast %222 : vector<8xf32> to vector<8x1xf32>
    %224 = vector.broadcast %223 : vector<8x1xf32> to vector<8x8xf32>
    %225 = arith.subf %221, %224 : vector<8x8xf32>
    %226 = math.exp %225 : vector<8x8xf32>
    %cst_85 = arith.constant dense<0.000000e+00> : vector<8xf32>
    %227 = vector.multi_reduction <add>, %226, %cst_85 [1] : vector<8x8xf32> to vector<8xf32>
    %228 = vector.shape_cast %227 : vector<8xf32> to vector<8x1xf32>
    %229 = tpu.reciprocal %228 {approx = true} : vector<8x1xf32> -> vector<8x1xf32>
    %230 = vector.broadcast %229 : vector<8x1xf32> to vector<8x8xf32>
    %231 = arith.mulf %226, %230 : vector<8x8xf32>
    %cst_86 = arith.constant dense<0.000000e+00> : vector<8x8xf32>
    %232 = tpu.matmul %231, %218, %cst_86 {dimension_numbers = #tpu.dot_dimension_numbers<[1], [0], [0], [1], [0, 0, 1, 1], [], []>} : vector<8x8xf32>, vector<8x8xf32>, vector<8x8xf32> -> vector<8x8xf32>
    %233 = vector.extract_strided_slice %179 {offsets = [0, 24], sizes = [8, 8], strides = [1, 1]} : vector<8x32xf32> to vector<8x8xf32>
    %234 = vector.extract_strided_slice %180 {offsets = [0, 24], sizes = [8, 8], strides = [1, 1]} : vector<8x32xf32> to vector<8x8xf32>
    %235 = vector.extract_strided_slice %181 {offsets = [0, 24], sizes = [8, 8], strides = [1, 1]} : vector<8x32xf32> to vector<8x8xf32>
    %cst_87 = arith.constant dense<0.000000e+00> : vector<8x8xf32>
    %236 = tpu.matmul %233, %234, %cst_87 {dimension_numbers = #tpu.dot_dimension_numbers<[1], [1], [0], [0], [0, 0, 1, 0], [], []>} : vector<8x8xf32>, vector<8x8xf32>, vector<8x8xf32> -> vector<8x8xf32>
    %237 = vector.broadcast %3 : f32 to vector<8x8xf32>
    %238 = arith.mulf %236, %237 : vector<8x8xf32>
    %cst_88 = arith.constant dense<0xFF800000> : vector<8xf32>
    %239 = vector.multi_reduction <maximumf>, %238, %cst_88 [1] : vector<8x8xf32> to vector<8xf32>
    %240 = vector.shape_cast %239 : vector<8xf32> to vector<8x1xf32>
    %241 = vector.broadcast %240 : vector<8x1xf32> to vector<8x8xf32>
    %242 = arith.subf %238, %241 : vector<8x8xf32>
    %243 = math.exp %242 : vector<8x8xf32>
    %cst_89 = arith.constant dense<0.000000e+00> : vector<8xf32>
    %244 = vector.multi_reduction <add>, %243, %cst_89 [1] : vector<8x8xf32> to vector<8xf32>
    %245 = vector.shape_cast %244 : vector<8xf32> to vector<8x1xf32>
    %246 = tpu.reciprocal %245 {approx = true} : vector<8x1xf32> -> vector<8x1xf32>
    %247 = vector.broadcast %246 : vector<8x1xf32> to vector<8x8xf32>
    %248 = arith.mulf %243, %247 : vector<8x8xf32>
    %cst_90 = arith.constant dense<0.000000e+00> : vector<8x8xf32>
    %249 = tpu.matmul %248, %235, %cst_90 {dimension_numbers = #tpu.dot_dimension_numbers<[1], [0], [0], [1], [0, 0, 1, 1], [], []>} : vector<8x8xf32>, vector<8x8xf32>, vector<8x8xf32> -> vector<8x8xf32>
    %250 = tpu.concatenate %198, %215, %232, %249 in 1 : vector<8x8xf32>, vector<8x8xf32>, vector<8x8xf32>, vector<8x8xf32> -> vector<8x32xf32>
    %cst_91 = arith.constant dense<0.000000e+00> : vector<8x32xf32>
    %251 = tpu.matmul %250, %161, %cst_91 {dimension_numbers = #tpu.dot_dimension_numbers<[1], [0], [0], [1], [0, 0, 1, 1], [], []>} : vector<8x32xf32>, vector<32x32xf32>, vector<8x32xf32> -> vector<8x32xf32>
    %252 = vector.broadcast %170 : vector<1x32xf32> to vector<8x32xf32>
    %253 = arith.addf %251, %252 : vector<8x32xf32>
    %254 = arith.addf %155, %253 : vector<8x32xf32>
    %cst_92 = arith.constant dense<0.000000e+00> : vector<8xf32>
    %255 = vector.multi_reduction <add>, %254, %cst_92 [1] : vector<8x32xf32> to vector<8xf32>
    %256 = vector.shape_cast %255 : vector<8xf32> to vector<8x1xf32>
    %cst_93 = arith.constant 3.200000e+01 : f32
    %257 = vector.broadcast %cst_93 : f32 to vector<8x1xf32>
    %258 = arith.divf %256, %257 : vector<8x1xf32>
    %259 = vector.broadcast %258 : vector<8x1xf32> to vector<8x32xf32>
    %260 = arith.subf %254, %259 : vector<8x32xf32>
    %261 = arith.mulf %260, %260 : vector<8x32xf32>
    %cst_94 = arith.constant dense<0.000000e+00> : vector<8xf32>
    %262 = vector.multi_reduction <add>, %261, %cst_94 [1] : vector<8x32xf32> to vector<8xf32>
    %263 = vector.shape_cast %262 : vector<8xf32> to vector<8x1xf32>
    %cst_95 = arith.constant 3.200000e+01 : f32
    %264 = vector.broadcast %cst_95 : f32 to vector<8x1xf32>
    %265 = arith.divf %263, %264 : vector<8x1xf32>
    %266 = vector.broadcast %258 : vector<8x1xf32> to vector<8x32xf32>
    %267 = arith.subf %254, %266 : vector<8x32xf32>
    %cst_96 = arith.constant 9.99999974E-6 : f32
    %268 = vector.broadcast %cst_96 : f32 to vector<8x1xf32>
    %269 = arith.addf %265, %268 : vector<8x1xf32>
    %270 = math.rsqrt %269 : vector<8x1xf32>
    %271 = vector.broadcast %270 : vector<8x1xf32> to vector<8x32xf32>
    %272 = arith.mulf %267, %271 : vector<8x32xf32>
    %273 = vector.broadcast %171 : vector<1x32xf32> to vector<8x32xf32>
    %274 = arith.mulf %272, %273 : vector<8x32xf32>
    %275 = vector.broadcast %172 : vector<1x32xf32> to vector<8x32xf32>
    %276 = arith.addf %274, %275 : vector<8x32xf32>
    %cst_97 = arith.constant dense<0.000000e+00> : vector<8x64xf32>
    %277 = tpu.matmul %276, %163, %cst_97 {dimension_numbers = #tpu.dot_dimension_numbers<[1], [0], [0], [1], [0, 0, 1, 1], [], []>} : vector<8x32xf32>, vector<32x64xf32>, vector<8x64xf32> -> vector<8x64xf32>
    %278 = vector.broadcast %165 : vector<1x64xf32> to vector<8x64xf32>
    %279 = arith.addf %277, %278 : vector<8x64xf32>
    %cst_98 = arith.constant 0.000000e+00 : f32
    %280 = vector.broadcast %cst_98 : f32 to vector<8x64xf32>
    %281 = arith.maximumf %279, %280 : vector<8x64xf32>
    %cst_99 = arith.constant dense<0.000000e+00> : vector<8x32xf32>
    %282 = tpu.matmul %281, %167, %cst_99 {dimension_numbers = #tpu.dot_dimension_numbers<[1], [0], [0], [1], [0, 0, 1, 1], [], []>} : vector<8x64xf32>, vector<64x32xf32>, vector<8x32xf32> -> vector<8x32xf32>
    %283 = vector.broadcast %173 : vector<1x32xf32> to vector<8x32xf32>
    %284 = arith.addf %282, %283 : vector<8x32xf32>
    %285 = arith.addf %276, %284 : vector<8x32xf32>
    %cst_100 = arith.constant dense<0.000000e+00> : vector<8xf32>
    %286 = vector.multi_reduction <add>, %285, %cst_100 [1] : vector<8x32xf32> to vector<8xf32>
    %287 = vector.shape_cast %286 : vector<8xf32> to vector<8x1xf32>
    %cst_101 = arith.constant 3.200000e+01 : f32
    %288 = vector.broadcast %cst_101 : f32 to vector<8x1xf32>
    %289 = arith.divf %287, %288 : vector<8x1xf32>
    %290 = vector.broadcast %289 : vector<8x1xf32> to vector<8x32xf32>
    %291 = arith.subf %285, %290 : vector<8x32xf32>
    %292 = arith.mulf %291, %291 : vector<8x32xf32>
    %cst_102 = arith.constant dense<0.000000e+00> : vector<8xf32>
    %293 = vector.multi_reduction <add>, %292, %cst_102 [1] : vector<8x32xf32> to vector<8xf32>
    %294 = vector.shape_cast %293 : vector<8xf32> to vector<8x1xf32>
    %cst_103 = arith.constant 3.200000e+01 : f32
    %295 = vector.broadcast %cst_103 : f32 to vector<8x1xf32>
    %296 = arith.divf %294, %295 : vector<8x1xf32>
    %297 = vector.broadcast %289 : vector<8x1xf32> to vector<8x32xf32>
    %298 = arith.subf %285, %297 : vector<8x32xf32>
    %cst_104 = arith.constant 9.99999974E-6 : f32
    %299 = vector.broadcast %cst_104 : f32 to vector<8x1xf32>
    %300 = arith.addf %296, %299 : vector<8x1xf32>
    %301 = math.rsqrt %300 : vector<8x1xf32>
    %302 = vector.broadcast %301 : vector<8x1xf32> to vector<8x32xf32>
    %303 = arith.mulf %298, %302 : vector<8x32xf32>
    %304 = vector.broadcast %174 : vector<1x32xf32> to vector<8x32xf32>
    %305 = arith.mulf %303, %304 : vector<8x32xf32>
    %306 = vector.broadcast %175 : vector<1x32xf32> to vector<8x32xf32>
    %307 = arith.addf %305, %306 : vector<8x32xf32>
    %c0_105 = arith.constant 0 : index
    %c0_106 = arith.constant 0 : index
    %308 = vector.load %arg8[%c0_105, %c0_106] : memref<1x32xf32, #tpu.memory_space<vmem>>, vector<1x32xf32>
    %309 = vector.broadcast %308 : vector<1x32xf32> to vector<8x32xf32>
    %310 = arith.mulf %307, %309 : vector<8x32xf32>
    %cst_107 = arith.constant dense<0.000000e+00> : vector<8xf32>
    %311 = vector.multi_reduction <add>, %310, %cst_107 [1] : vector<8x32xf32> to vector<8xf32>
    %312 = vector.shape_cast %311 : vector<8xf32> to vector<8x1xf32>
    %c0_108 = arith.constant 0 : index
    %c0_109 = arith.constant 0 : index
    %313 = vector.load %arg9[%c0_108, %c0_109] : memref<1x1xf32, #tpu.memory_space<vmem>>, vector<1x1xf32>
    %314 = vector.broadcast %313 : vector<1x1xf32> to vector<8x1xf32>
    %315 = arith.addf %312, %314 : vector<8x1xf32>
    %316 = vector.shape_cast %315 : vector<8x1xf32> to vector<8x1xf32>
    %317 = vector.broadcast %316 : vector<8x1xf32> to vector<8x128xf32>
    %c0_110 = arith.constant 0 : index
    %c0_111 = arith.constant 0 : index
    %318 = vector.load %arg10[%c0_110, %c0_111] : memref<8x128xf32, #tpu.memory_space<vmem>>, vector<8x128xf32>
    tpu.vector_store %arg10[%c0_110, %c0_111], %317 {strides = array<i32>} : memref<8x128xf32, #tpu.memory_space<vmem>>, vector<8x128xf32>,
    return
  }
}

</mosaic_0001>

<llo_original>
// kernel: youtube_predictor_forward.1
$region0: #{youtube_predictor_forward.1}
  #allocation0 [shape = 'u32[]', space=smem, size = 0x4, offset = 0x4, fixed_abs, tag = 'smem constant byte address 0x4 - core index']
  #allocation1 [shape = 'u32[144,128]{1,0:T(1,128)}', space=vmem, size = 0x12000, scoped, tag = 'internal scratch']
  #allocation2 [shape = 'f32[1,1]{1,0:T(1,128)S(1)}', space=vmem, size = 0x200, scoped, tag = 'scoped memory for youtube_predictor_forward.1']
  %s0 = inlined_call_operand.vmem [shape: f32[8,16], index: 0, kind: input, shape index: {}]
  %s1 = inlined_call_operand.vmem [shape: f32[2,32,96], index: 1, kind: input, shape index: {}]
  %s2 = inlined_call_operand.vmem [shape: f32[2,1,96], index: 2, kind: input, shape index: {}]
  %s3 = inlined_call_operand.vmem [shape: f32[2,32,32], index: 3, kind: input, shape index: {}]
  %s4 = inlined_call_operand.vmem [shape: f32[2,32,64], index: 4, kind: input, shape index: {}]
  %s5 = inlined_call_operand.vmem [shape: f32[2,1,64], index: 5, kind: input, shape index: {}]
  %s6 = inlined_call_operand.vmem [shape: f32[2,64,32], index: 6, kind: input, shape index: {}]
  %s7 = inlined_call_operand.vmem [shape: f32[2,6,32], index: 7, kind: input, shape index: {}]
  %s8 = inlined_call_operand.vmem [shape: f32[1,32], index: 8, kind: input, shape index: {}]
  %s9 = inlined_call_operand.<no memory space> [shape: f32[1,1], index: 9, kind: input, shape index: {}]
  %s10 = inlined_call_operand.vmem [shape: f32[8,128], index: 10, kind: output, shape index: {}]
  %s11 = sld [smem:[#allocation0]]
  $region50: #{youtube_predictor_forward.1} parent=0
    _
  %s13 = ssub.s32 1, %s11
  %s14 = scalar_select 0, %s13, %s11
  %v15 = vstv %s9
  %16 = vst [vmem:[#allocation2] sm:$0x1] %v15
  // Predicated region
  $region2: #{youtube_predictor_forward.1} parent=0 // pred_check
    _
  $region3: #{youtube_predictor_forward.1} parent=0 // pred_check_branch
    %18 = sbr.rel (0) target = $region5
  $region4: #{youtube_predictor_forward.1} parent=0 // pred_region
    _
  $region5: #{youtube_predictor_forward.1} parent=0 // pred_fallthru
    _
  // Predicated region
  $region6: #{youtube_predictor_forward.1} parent=0 // pred_check
    _
  $region7: #{youtube_predictor_forward.1} parent=0 // pred_check_branch
    %20 = sbr.rel (0) target = $region9
  $region8: #{youtube_predictor_forward.1} parent=0 // pred_region
    _
  $region9: #{youtube_predictor_forward.1} parent=0 // pred_fallthru
    _
  // Predicated region
  $region10: #{youtube_predictor_forward.1} parent=0 // pred_check
    _
  $region11: #{youtube_predictor_forward.1} parent=0 // pred_check_branch
    %22 = sbr.rel (0) target = $region13
  $region12: #{youtube_predictor_forward.1} parent=0 // pred_region
    _
  $region13: #{youtube_predictor_forward.1} parent=0 // pred_fallthru
    _
  // Predicated region
  $region14: #{youtube_predictor_forward.1} parent=0 // pred_check
    _
  $region15: #{youtube_predictor_forward.1} parent=0 // pred_check_branch
    %24 = sbr.rel (0) target = $region17
  $region16: #{youtube_predictor_forward.1} parent=0 // pred_region
    _
  $region17: #{youtube_predictor_forward.1} parent=0 // pred_fallthru
    _
  // Predicated region
  $region18: #{youtube_predictor_forward.1} parent=0 // pred_check
    _
  $region19: #{youtube_predictor_forward.1} parent=0 // pred_check_branch
    %26 = sbr.rel (0) target = $region21
  $region20: #{youtube_predictor_forward.1} parent=0 // pred_region
    _
  $region21: #{youtube_predictor_forward.1} parent=0 // pred_fallthru
    _
  // Predicated region
  $region22: #{youtube_predictor_forward.1} parent=0 // pred_check
    _
  $region23: #{youtube_predictor_forward.1} parent=0 // pred_check_branch
    %28 = sbr.rel (0) target = $region25
  $region24: #{youtube_predictor_forward.1} parent=0 // pred_region
    _
  $region25: #{youtube_predictor_forward.1} parent=0 // pred_fallthru
    _
  // Predicated region
  $region26: #{youtube_predictor_forward.1} parent=0 // pred_check
    _
  $region27: #{youtube_predictor_forward.1} parent=0 // pred_check_branch
    %30 = sbr.rel (0) target = $region29
  $region28: #{youtube_predictor_forward.1} parent=0 // pred_region
    _
  $region29: #{youtube_predictor_forward.1} parent=0 // pred_fallthru
    _
  // Predicated region
  $region30: #{youtube_predictor_forward.1} parent=0 // pred_check
    _
  $region31: #{youtube_predictor_forward.1} parent=0 // pred_check_branch
    %32 = sbr.rel (0) target = $region33
  $region32: #{youtube_predictor_forward.1} parent=0 // pred_region
    _
  $region33: #{youtube_predictor_forward.1} parent=0 // pred_fallthru
    _
  // Predicated region
  $region34: #{youtube_predictor_forward.1} parent=0 // pred_check
    _
  $region35: #{youtube_predictor_forward.1} parent=0 // pred_check_branch
    %34 = sbr.rel (0) target = $region37
  $region36: #{youtube_predictor_forward.1} parent=0 // pred_region
    _
  $region37: #{youtube_predictor_forward.1} parent=0 // pred_fallthru
    _
  // Predicated region
  $region38: #{youtube_predictor_forward.1} parent=0 // pred_check
    _
  $region39: #{youtube_predictor_forward.1} parent=0 // pred_check_branch
    %36 = sbr.rel (0) target = $region41
  $region40: #{youtube_predictor_forward.1} parent=0 // pred_region
    _
  $region41: #{youtube_predictor_forward.1} parent=0 // pred_fallthru
    _
  %v37 = vld [vmem:[%s0] sm:$0xff]
  %39 = vrot.lane.b32.xlu0 %v37, 16
  %v40 = vpop.permute.xlu0 %39
  %vm42 = vcmask 130048
  %v43 = vsel %vm42, %v37, %v40
  %v44 = vld [vmem:[%s1] sm:$0xff]
  %v45 = vld [vmem:[%s1 + $0x8] sm:$0xff]
  %v46 = vld [vmem:[%s1 + $0x10] sm:$0xff]
  %v47 = vld [vmem:[%s1 + $0x18] sm:$0xff]
  %v48 = vld [vmem:[%s2] sm:$0x1]
  %v49 = vld [vmem:[%s3] sm:$0xff]
  %v50 = vld [vmem:[%s3 + $0x8] sm:$0xff]
  %v51 = vld [vmem:[%s3 + $0x10] sm:$0xff]
  %v52 = vld [vmem:[%s3 + $0x18] sm:$0xff]
  %v53 = vld [vmem:[%s4] sm:$0xff]
  %v54 = vld [vmem:[%s4 + $0x8] sm:$0xff]
  %v55 = vld [vmem:[%s4 + $0x10] sm:$0xff]
  %v56 = vld [vmem:[%s4 + $0x18] sm:$0xff]
  %v57 = vld [vmem:[%s5] sm:$0x1]
  %v58 = vld [vmem:[%s6] sm:$0xff]
  %v59 = vld [vmem:[%s6 + $0x8] sm:$0xff]
  %v60 = vld [vmem:[%s6 + $0x10] sm:$0xff]
  %v61 = vld [vmem:[%s6 + $0x18] sm:$0xff]
  %v62 = vld [vmem:[%s6 + $0x20] sm:$0xff]
  %v63 = vld [vmem:[%s6 + $0x28] sm:$0xff]
  %v64 = vld [vmem:[%s6 + $0x30] sm:$0xff]
  %v65 = vld [vmem:[%s6 + $0x38] sm:$0xff]
  %v66 = vld [vmem:[%s7] sm:$0x3f]
  %v68 = vlaneseq
  %v69 = vshrl.u32 %v68, 7
  %v70 = vsub.s32 0, %v69
  %v71 = vrot.slane %v48, %v70
  %vm73 = vcmask 261120
  %v75 = vsel %vm73, %v43, 0
  %77 = vmatprep.subr.mxu0 0.0
  %78 = vmatpush1.msra.mxu0 %v44
  %79 = vmatprep.subr.mxu0 0.0
  %80 = vmatpush1.msra.mxu0 %v45
  %81 = vmatprep.subr.mxu0 0.0
  %82 = vmatpush1.msra.mxu0 %v46
  %83 = vmatprep.subr.mxu0 0.0
  %84 = vmatpush1.msra.mxu0 %v47
  %85 = vmatprep.subr.mxu0 0.0
  %86 = vmatpush1.msra.mxu0 0.0
  %87 = vmatprep.subr.mxu0 0.0
  %88 = vmatpush1.msra.mxu0 0.0
  %89 = vmatprep.subr.mxu0 0.0
  %90 = vmatpush1.msra.mxu0 0.0
  %91 = vmatprep.subr.mxu0 0.0
  %92 = vmatpush1.msra.mxu0 0.0
  %93 = vmatprep.subr.mxu0 0.0
  %94 = vmatpush1.msra.mxu0 0.0
  %95 = vmatprep.subr.mxu0 0.0
  %96 = vmatpush1.msra.mxu0 0.0
  %97 = vmatprep.subr.mxu0 0.0
  %98 = vmatpush1.msra.mxu0 0.0
  %99 = vmatprep.subr.mxu0 0.0
  %100 = vmatpush1.msra.mxu0 0.0
  %101 = vmatprep.subr.mxu0 0.0
  %102 = vmatpush1.msra.mxu0 0.0
  %103 = vmatprep.subr.mxu0 0.0
  %104 = vmatpush1.msra.mxu0 0.0
  %105 = vmatprep.subr.mxu0 0.0
  %106 = vmatpush1.msra.mxu0 0.0
  %107 = vmatprep.subr.mxu0 0.0
  %108 = vmatpush1.msra.mxu0 0.0
  %109 = vmatprep.subr.mxu0 0.0
  %110 = vmatpush1.msra.mxu0 0.0
  %111 = vmatprep.subr.mxu0 0.0
  %112 = vmatpush1.msra.mxu0 0.0
  %113 = vmatprep.subr.mxu0 0.0
  %114 = vmatpush1.msra.mxu0 0.0
  %115 = vmatprep.subr.mxu0 0.0
  %116 = vmatpush1.msra.mxu0 0.0
  %117 = vmatprep.subr.mxu0 0.0
  %118 = vmatpush1.msra.mxu0 0.0
  %119 = vmatprep.subr.mxu0 0.0
  %120 = vmatpush1.msra.mxu0 0.0
  %121 = vmatprep.subr.mxu0 0.0
  %122 = vmatpush1.msra.mxu0 0.0
  %123 = vmatprep.subr.mxu0 0.0
  %124 = vmatpush1.msra.mxu0 0.0
  %125 = vmatprep.subr.mxu0 0.0
  %126 = vmatpush1.msra.mxu0 0.0
  %127 = vmatprep.subr.mxu0 0.0
  %128 = vmatpush1.msra.mxu0 0.0
  %129 = vmatprep.subr.mxu0 0.0
  %130 = vmatpush1.msra.mxu0 0.0
  %131 = vmatprep.subr.mxu0 0.0
  %132 = vmatpush1.msra.mxu0 0.0
  %133 = vmatprep.subr.mxu0 0.0
  %134 = vmatpush1.msra.mxu0 0.0
  %135 = vmatprep.subr.mxu0 0.0
  %136 = vmatpush1.msra.mxu0 0.0
  %137 = vmatprep.subr.mxu0 0.0
  %138 = vmatpush1.msra.mxu0 0.0
  %139 = vmatprep.subr.mxu0 0.0
  %140 = vmatpush1.msra.mxu0 0.0
  %141 = vmatprep.mubr.f32.mxu0 0.0
  %142 = vmatmul.mubr.f32.gmra.mrb[0].mxu0 %v75
  %v143 = vpop.f32.mrb[0].mxu0
  %v144 = vadd.f32 %v71, %v143
  %v145 = vpop.f32.mrb[0].mxu0
  %146 = vdwg.mxu0
  %148 = vrot.lane.b32.xlu0 %v144, 96
  %v149 = vpop.permute.xlu0 %148
  %vm150 = vcmask 64512
  %v151 = vsel %vm150, %v144, 0
  %v153 = vsel %vm150, %v149, 0
  %155 = vmatprep.subr.mxu0 0.0
  %156 = vmatpush1.xpose.msra.mxu0 %v153
  %157 = vmatprep.subr.mxu0 0.0
  %158 = vmatpush1.xpose.msra.mxu0 0.0
  %159 = vmatprep.subr.mxu0 0.0
  %160 = vmatpush1.xpose.msra.mxu0 0.0
  %161 = vmatprep.subr.mxu0 0.0
  %162 = vmatpush1.xpose.msra.mxu0 0.0
  %163 = vmatprep.subr.mxu0 0.0
  %164 = vmatpush1.xpose.msra.mxu0 0.0
  %165 = vmatprep.subr.mxu0 0.0
  %166 = vmatpush1.xpose.msra.mxu0 0.0
  %167 = vmatprep.subr.mxu0 0.0
  %168 = vmatpush1.xpose.msra.mxu0 0.0
  %169 = vmatprep.subr.mxu0 0.0
  %170 = vmatpush1.xpose.msra.mxu0 0.0
  %171 = vmatprep.subr.mxu0 0.0
  %172 = vmatpush1.xpose.msra.mxu0 0.0
  %173 = vmatprep.subr.mxu0 0.0
  %174 = vmatpush1.xpose.msra.mxu0 0.0
  %175 = vmatprep.subr.mxu0 0.0
  %176 = vmatpush1.xpose.msra.mxu0 0.0
  %177 = vmatprep.subr.mxu0 0.0
  %178 = vmatpush1.xpose.msra.mxu0 0.0
  %179 = vmatprep.subr.mxu0 0.0
  %180 = vmatpush1.xpose.msra.mxu0 0.0
  %181 = vmatprep.subr.mxu0 0.0
  %182 = vmatpush1.xpose.msra.mxu0 0.0
  %183 = vmatprep.subr.mxu0 0.0
  %184 = vmatpush1.xpose.msra.mxu0 0.0
  %185 = vmatprep.subr.mxu0 0.0
  %186 = vmatpush1.xpose.msra.mxu0 0.0
  %187 = vmatprep.subr.mxu0 0.0
  %188 = vmatpush1.xpose.msra.mxu0 0.0
  %189 = vmatprep.subr.mxu0 0.0
  %190 = vmatpush1.xpose.msra.mxu0 0.0
  %191 = vmatprep.subr.mxu0 0.0
  %192 = vmatpush1.xpose.msra.mxu0 0.0
  %193 = vmatprep.subr.mxu0 0.0
  %194 = vmatpush1.xpose.msra.mxu0 0.0
  %195 = vmatprep.subr.mxu0 0.0
  %196 = vmatpush1.xpose.msra.mxu0 0.0
  %197 = vmatprep.subr.mxu0 0.0
  %198 = vmatpush1.xpose.msra.mxu0 0.0
  %199 = vmatprep.subr.mxu0 0.0
  %200 = vmatpush1.xpose.msra.mxu0 0.0
  %201 = vmatprep.subr.mxu0 0.0
  %202 = vmatpush1.xpose.msra.mxu0 0.0
  %203 = vmatprep.subr.mxu0 0.0
  %204 = vmatpush1.xpose.msra.mxu0 0.0
  %205 = vmatprep.subr.mxu0 0.0
  %206 = vmatpush1.xpose.msra.mxu0 0.0
  %207 = vmatprep.subr.mxu0 0.0
  %208 = vmatpush1.xpose.msra.mxu0 0.0
  %209 = vmatprep.subr.mxu0 0.0
  %210 = vmatpush1.xpose.msra.mxu0 0.0
  %211 = vmatprep.subr.mxu0 0.0
  %212 = vmatpush1.xpose.msra.mxu0 0.0
  %213 = vmatprep.subr.mxu0 0.0
  %214 = vmatpush1.xpose.msra.mxu0 0.0
  %215 = vmatprep.subr.mxu0 0.0
  %216 = vmatpush1.xpose.msra.mxu0 0.0
  %217 = vmatprep.subr.mxu0 0.0
  %218 = vmatpush1.xpose.msra.mxu0 0.0
  %219 = vmatprep.mubr.f32.mxu0 0.0
  %220 = vmatmul.mubr.f32.gmra.mrb[0].mxu0 %v151
  %v221 = vpop.f32.mrb[0].mxu0
  %v222 = vadd.f32 0.0, %v221
  %v223 = vpop.f32.mrb[0].mxu0
  %224 = vdwg.mxu0
  %v225 = vmul.f32 %v222, 0.35355338
  %v226 = vsel %vm150, %v225, -inf
  %227 = vmax.xlane.f32.xlu0 %v226
  %v228 = vpop.xlane.xlu0 %227
  %v229 = vsub.f32 %v225, %v228
  %v230 = vmul.f32 %v229, 1.442695
  %v231 = vpow.pop %v230
  %v232 = vsel %vm150, %v231, 0.0
  %233 = vadd.xlane.f32.xlu0 %v232
  %v234 = vpop.xlane.xlu0 %233
  %v235 = vrcp.pop %v234
  %v236 = vmul.f32 %v231, %v235
  %237 = vrot.lane.b32.xlu0 %v144, 64
  %v238 = vpop.permute.xlu0 %237
  %v241 = vsel %vm150, %v236, 0
  %243 = vmatprep.subr.mxu0 0.0
  %244 = vmatpush1.msra.mxu0 %v238
  %245 = vmatprep.subr.mxu0 0.0
  %246 = vmatpush1.msra.mxu0 0.0
  %247 = vmatprep.subr.mxu0 0.0
  %248 = vmatpush1.msra.mxu0 0.0
  %249 = vmatprep.subr.mxu0 0.0
  %250 = vmatpush1.msra.mxu0 0.0
  %251 = vmatprep.subr.mxu0 0.0
  %252 = vmatpush1.msra.mxu0 0.0
  %253 = vmatprep.subr.mxu0 0.0
  %254 = vmatpush1.msra.mxu0 0.0
  %255 = vmatprep.subr.mxu0 0.0
  %256 = vmatpush1.msra.mxu0 0.0
  %257 = vmatprep.subr.mxu0 0.0
  %258 = vmatpush1.msra.mxu0 0.0
  %259 = vmatprep.subr.mxu0 0.0
  %260 = vmatpush1.msra.mxu0 0.0
  %261 = vmatprep.subr.mxu0 0.0
  %262 = vmatpush1.msra.mxu0 0.0
  %263 = vmatprep.subr.mxu0 0.0
  %264 = vmatpush1.msra.mxu0 0.0
  %265 = vmatprep.subr.mxu0 0.0
  %266 = vmatpush1.msra.mxu0 0.0
  %267 = vmatprep.subr.mxu0 0.0
  %268 = vmatpush1.msra.mxu0 0.0
  %269 = vmatprep.subr.mxu0 0.0
  %270 = vmatpush1.msra.mxu0 0.0
  %271 = vmatprep.subr.mxu0 0.0
  %272 = vmatpush1.msra.mxu0 0.0
  %273 = vmatprep.subr.mxu0 0.0
  %274 = vmatpush1.msra.mxu0 0.0
  %275 = vmatprep.subr.mxu0 0.0
  %276 = vmatpush1.msra.mxu0 0.0
  %277 = vmatprep.subr.mxu0 0.0
  %278 = vmatpush1.msra.mxu0 0.0
  %279 = vmatprep.subr.mxu0 0.0
  %280 = vmatpush1.msra.mxu0 0.0
  %281 = vmatprep.subr.mxu0 0.0
  %282 = vmatpush1.msra.mxu0 0.0
  %283 = vmatprep.subr.mxu0 0.0
  %284 = vmatpush1.msra.mxu0 0.0
  %285 = vmatprep.subr.mxu0 0.0
  %286 = vmatpush1.msra.mxu0 0.0
  %287 = vmatprep.subr.mxu0 0.0
  %288 = vmatpush1.msra.mxu0 0.0
  %289 = vmatprep.subr.mxu0 0.0
  %290 = vmatpush1.msra.mxu0 0.0
  %291 = vmatprep.subr.mxu0 0.0
  %292 = vmatpush1.msra.mxu0 0.0
  %293 = vmatprep.subr.mxu0 0.0
  %294 = vmatpush1.msra.mxu0 0.0
  %295 = vmatprep.subr.mxu0 0.0
  %296 = vmatpush1.msra.mxu0 0.0
  %297 = vmatprep.subr.mxu0 0.0
  %298 = vmatpush1.msra.mxu0 0.0
  %299 = vmatprep.subr.mxu0 0.0
  %300 = vmatpush1.msra.mxu0 0.0
  %301 = vmatprep.subr.mxu0 0.0
  %302 = vmatpush1.msra.mxu0 0.0
  %303 = vmatprep.subr.mxu0 0.0
  %304 = vmatpush1.msra.mxu0 0.0
  %305 = vmatprep.subr.mxu0 0.0
  %306 = vmatpush1.msra.mxu0 0.0
  %307 = vmatprep.mubr.f32.mxu0 0.0
  %308 = vmatmul.mubr.f32.gmra.mrb[0].mxu0 %v241
  %v309 = vpop.f32.mrb[0].mxu0
  %v310 = vadd.f32 0.0, %v309
  %v311 = vpop.f32.mrb[0].mxu0
  %312 = vdwg.mxu0
  %313 = vrot.lane.b32.xlu0 %v144, 120
  %v314 = vpop.permute.xlu0 %313
  %315 = vrot.lane.b32.xlu0 %v144, 88
  %v316 = vpop.permute.xlu0 %315
  %v317 = vsel %vm150, %v314, 0
  %v319 = vsel %vm150, %v316, 0
  %321 = vmatprep.subr.mxu0 0.0
  %322 = vmatpush1.xpose.msra.mxu0 %v319
  %323 = vmatprep.subr.mxu0 0.0
  %324 = vmatpush1.xpose.msra.mxu0 0.0
  %325 = vmatprep.subr.mxu0 0.0
  %326 = vmatpush1.xpose.msra.mxu0 0.0
  %327 = vmatprep.subr.mxu0 0.0
  %328 = vmatpush1.xpose.msra.mxu0 0.0
  %329 = vmatprep.subr.mxu0 0.0
  %330 = vmatpush1.xpose.msra.mxu0 0.0
  %331 = vmatprep.subr.mxu0 0.0
  %332 = vmatpush1.xpose.msra.mxu0 0.0
  %333 = vmatprep.subr.mxu0 0.0
  %334 = vmatpush1.xpose.msra.mxu0 0.0
  %335 = vmatprep.subr.mxu0 0.0
  %336 = vmatpush1.xpose.msra.mxu0 0.0
  %337 = vmatprep.subr.mxu0 0.0
  %338 = vmatpush1.xpose.msra.mxu0 0.0
  %339 = vmatprep.subr.mxu0 0.0
  %340 = vmatpush1.xpose.msra.mxu0 0.0
  %341 = vmatprep.subr.mxu0 0.0
  %342 = vmatpush1.xpose.msra.mxu0 0.0
  %343 = vmatprep.subr.mxu0 0.0
  %344 = vmatpush1.xpose.msra.mxu0 0.0
  %345 = vmatprep.subr.mxu0 0.0
  %346 = vmatpush1.xpose.msra.mxu0 0.0
  %347 = vmatprep.subr.mxu0 0.0
  %348 = vmatpush1.xpose.msra.mxu0 0.0
  %349 = vmatprep.subr.mxu0 0.0
  %350 = vmatpush1.xpose.msra.mxu0 0.0
  %351 = vmatprep.subr.mxu0 0.0
  %352 = vmatpush1.xpose.msra.mxu0 0.0
  %353 = vmatprep.subr.mxu0 0.0
  %354 = vmatpush1.xpose.msra.mxu0 0.0
  %355 = vmatprep.subr.mxu0 0.0
  %356 = vmatpush1.xpose.msra.mxu0 0.0
  %357 = vmatprep.subr.mxu0 0.0
  %358 = vmatpush1.xpose.msra.mxu0 0.0
  %359 = vmatprep.subr.mxu0 0.0
  %360 = vmatpush1.xpose.msra.mxu0 0.0
  %361 = vmatprep.subr.mxu0 0.0
  %362 = vmatpush1.xpose.msra.mxu0 0.0
  %363 = vmatprep.subr.mxu0 0.0
  %364 = vmatpush1.xpose.msra.mxu0 0.0
  %365 = vmatprep.subr.mxu0 0.0
  %366 = vmatpush1.xpose.msra.mxu0 0.0
  %367 = vmatprep.subr.mxu0 0.0
  %368 = vmatpush1.xpose.msra.mxu0 0.0
  %369 = vmatprep.subr.mxu0 0.0
  %370 = vmatpush1.xpose.msra.mxu0 0.0
  %371 = vmatprep.subr.mxu0 0.0
  %372 = vmatpush1.xpose.msra.mxu0 0.0
  %373 = vmatprep.subr.mxu0 0.0
  %374 = vmatpush1.xpose.msra.mxu0 0.0
  %375 = vmatprep.subr.mxu0 0.0
  %376 = vmatpush1.xpose.msra.mxu0 0.0
  %377 = vmatprep.subr.mxu0 0.0
  %378 = vmatpush1.xpose.msra.mxu0 0.0
  %379 = vmatprep.subr.mxu0 0.0
  %380 = vmatpush1.xpose.msra.mxu0 0.0
  %381 = vmatprep.subr.mxu0 0.0
  %382 = vmatpush1.xpose.msra.mxu0 0.0
  %383 = vmatprep.subr.mxu0 0.0
  %384 = vmatpush1.xpose.msra.mxu0 0.0
  %385 = vmatprep.mubr.f32.mxu0 0.0
  %386 = vmatmul.mubr.f32.gmra.mrb[0].mxu0 %v317
  %v387 = vpop.f32.mrb[0].mxu0
  %v388 = vadd.f32 0.0, %v387
  %v389 = vpop.f32.mrb[0].mxu0
  %390 = vdwg.mxu0
  %v391 = vmul.f32 %v388, 0.35355338
  %v392 = vsel %vm150, %v391, -inf
  %393 = vmax.xlane.f32.xlu0 %v392
  %v394 = vpop.xlane.xlu0 %393
  %v395 = vsub.f32 %v391, %v394
  %v396 = vmul.f32 %v395, 1.442695
  %v397 = vpow.pop %v396
  %v398 = vsel %vm150, %v397, 0.0
  %399 = vadd.xlane.f32.xlu0 %v398
  %v400 = vpop.xlane.xlu0 %399
  %v401 = vrcp.pop %v400
  %v402 = vmul.f32 %v397, %v401
  %403 = vrot.lane.b32.xlu0 %v144, 56
  %v404 = vpop.permute.xlu0 %403
  %v407 = vsel %vm150, %v402, 0
  %409 = vmatprep.subr.mxu0 0.0
  %410 = vmatpush1.msra.mxu0 %v404
  %411 = vmatprep.subr.mxu0 0.0
  %412 = vmatpush1.msra.mxu0 0.0
  %413 = vmatprep.subr.mxu0 0.0
  %414 = vmatpush1.msra.mxu0 0.0
  %415 = vmatprep.subr.mxu0 0.0
  %416 = vmatpush1.msra.mxu0 0.0
  %417 = vmatprep.subr.mxu0 0.0
  %418 = vmatpush1.msra.mxu0 0.0
  %419 = vmatprep.subr.mxu0 0.0
  %420 = vmatpush1.msra.mxu0 0.0
  %421 = vmatprep.subr.mxu0 0.0
  %422 = vmatpush1.msra.mxu0 0.0
  %423 = vmatprep.subr.mxu0 0.0
  %424 = vmatpush1.msra.mxu0 0.0
  %425 = vmatprep.subr.mxu0 0.0
  %426 = vmatpush1.msra.mxu0 0.0
  %427 = vmatprep.subr.mxu0 0.0
  %428 = vmatpush1.msra.mxu0 0.0
  %429 = vmatprep.subr.mxu0 0.0
  %430 = vmatpush1.msra.mxu0 0.0
  %431 = vmatprep.subr.mxu0 0.0
  %432 = vmatpush1.msra.mxu0 0.0
  %433 = vmatprep.subr.mxu0 0.0
  %434 = vmatpush1.msra.mxu0 0.0
  %435 = vmatprep.subr.mxu0 0.0
  %436 = vmatpush1.msra.mxu0 0.0
  %437 = vmatprep.subr.mxu0 0.0
  %438 = vmatpush1.msra.mxu0 0.0
  %439 = vmatprep.subr.mxu0 0.0
  %440 = vmatpush1.msra.mxu0 0.0
  %441 = vmatprep.subr.mxu0 0.0
  %442 = vmatpush1.msra.mxu0 0.0
  %443 = vmatprep.subr.mxu0 0.0
  %444 = vmatpush1.msra.mxu0 0.0
  %445 = vmatprep.subr.mxu0 0.0
  %446 = vmatpush1.msra.mxu0 0.0
  %447 = vmatprep.subr.mxu0 0.0
  %448 = vmatpush1.msra.mxu0 0.0
  %449 = vmatprep.subr.mxu0 0.0
  %450 = vmatpush1.msra.mxu0 0.0
  %451 = vmatprep.subr.mxu0 0.0
  %452 = vmatpush1.msra.mxu0 0.0
  %453 = vmatprep.subr.mxu0 0.0
  %454 = vmatpush1.msra.mxu0 0.0
  %455 = vmatprep.subr.mxu0 0.0
  %456 = vmatpush1.msra.mxu0 0.0
  %457 = vmatprep.subr.mxu0 0.0
  %458 = vmatpush1.msra.mxu0 0.0
  %459 = vmatprep.subr.mxu0 0.0
  %460 = vmatpush1.msra.mxu0 0.0
  %461 = vmatprep.subr.mxu0 0.0
  %462 = vmatpush1.msra.mxu0 0.0
  %463 = vmatprep.subr.mxu0 0.0
  %464 = vmatpush1.msra.mxu0 0.0
  %465 = vmatprep.subr.mxu0 0.0
  %466 = vmatpush1.msra.mxu0 0.0
  %467 = vmatprep.subr.mxu0 0.0
  %468 = vmatpush1.msra.mxu0 0.0
  %469 = vmatprep.subr.mxu0 0.0
  %470 = vmatpush1.msra.mxu0 0.0
  %471 = vmatprep.subr.mxu0 0.0
  %472 = vmatpush1.msra.mxu0 0.0
  %473 = vmatprep.mubr.f32.mxu0 0.0
  %474 = vmatmul.mubr.f32.gmra.mrb[0].mxu0 %v407
  %v475 = vpop.f32.mrb[0].mxu0
  %v476 = vadd.f32 0.0, %v475
  %v477 = vpop.f32.mrb[0].mxu0
  %478 = vdwg.mxu0
  %479 = vrot.lane.b32.xlu0 %v144, 112
  %v480 = vpop.permute.xlu0 %479
  %481 = vrot.lane.b32.xlu0 %v144, 80
  %v482 = vpop.permute.xlu0 %481
  %v483 = vsel %vm150, %v480, 0
  %v485 = vsel %vm150, %v482, 0
  %487 = vmatprep.subr.mxu0 0.0
  %488 = vmatpush1.xpose.msra.mxu0 %v485
  %489 = vmatprep.subr.mxu0 0.0
  %490 = vmatpush1.xpose.msra.mxu0 0.0
  %491 = vmatprep.subr.mxu0 0.0
  %492 = vmatpush1.xpose.msra.mxu0 0.0
  %493 = vmatprep.subr.mxu0 0.0
  %494 = vmatpush1.xpose.msra.mxu0 0.0
  %495 = vmatprep.subr.mxu0 0.0
  %496 = vmatpush1.xpose.msra.mxu0 0.0
  %497 = vmatprep.subr.mxu0 0.0
  %498 = vmatpush1.xpose.msra.mxu0 0.0
  %499 = vmatprep.subr.mxu0 0.0
  %500 = vmatpush1.xpose.msra.mxu0 0.0
  %501 = vmatprep.subr.mxu0 0.0
  %502 = vmatpush1.xpose.msra.mxu0 0.0
  %503 = vmatprep.subr.mxu0 0.0
  %504 = vmatpush1.xpose.msra.mxu0 0.0
  %505 = vmatprep.subr.mxu0 0.0
  %506 = vmatpush1.xpose.msra.mxu0 0.0
  %507 = vmatprep.subr.mxu0 0.0
  %508 = vmatpush1.xpose.msra.mxu0 0.0
  %509 = vmatprep.subr.mxu0 0.0
  %510 = vmatpush1.xpose.msra.mxu0 0.0
  %511 = vmatprep.subr.mxu0 0.0
  %512 = vmatpush1.xpose.msra.mxu0 0.0
  %513 = vmatprep.subr.mxu0 0.0
  %514 = vmatpush1.xpose.msra.mxu0 0.0
  %515 = vmatprep.subr.mxu0 0.0
  %516 = vmatpush1.xpose.msra.mxu0 0.0
  %517 = vmatprep.subr.mxu0 0.0
  %518 = vmatpush1.xpose.msra.mxu0 0.0
  %519 = vmatprep.subr.mxu0 0.0
  %520 = vmatpush1.xpose.msra.mxu0 0.0
  %521 = vmatprep.subr.mxu0 0.0
  %522 = vmatpush1.xpose.msra.mxu0 0.0
  %523 = vmatprep.subr.mxu0 0.0
  %524 = vmatpush1.xpose.msra.mxu0 0.0
  %525 = vmatprep.subr.mxu0 0.0
  %526 = vmatpush1.xpose.msra.mxu0 0.0
  %527 = vmatprep.subr.mxu0 0.0
  %528 = vmatpush1.xpose.msra.mxu0 0.0
  %529 = vmatprep.subr.mxu0 0.0
  %530 = vmatpush1.xpose.msra.mxu0 0.0
  %531 = vmatprep.subr.mxu0 0.0
  %532 = vmatpush1.xpose.msra.mxu0 0.0
  %533 = vmatprep.subr.mxu0 0.0
  %534 = vmatpush1.xpose.msra.mxu0 0.0
  %535 = vmatprep.subr.mxu0 0.0
  %536 = vmatpush1.xpose.msra.mxu0 0.0
  %537 = vmatprep.subr.mxu0 0.0
  %538 = vmatpush1.xpose.msra.mxu0 0.0
  %539 = vmatprep.subr.mxu0 0.0
  %540 = vmatpush1.xpose.msra.mxu0 0.0
  %541 = vmatprep.subr.mxu0 0.0
  %542 = vmatpush1.xpose.msra.mxu0 0.0
  %543 = vmatprep.subr.mxu0 0.0
  %544 = vmatpush1.xpose.msra.mxu0 0.0
  %545 = vmatprep.subr.mxu0 0.0
  %546 = vmatpush1.xpose.msra.mxu0 0.0
  %547 = vmatprep.subr.mxu0 0.0
  %548 = vmatpush1.xpose.msra.mxu0 0.0
  %549 = vmatprep.subr.mxu0 0.0
  %550 = vmatpush1.xpose.msra.mxu0 0.0
  %551 = vmatprep.mubr.f32.mxu0 0.0
  %552 = vmatmul.mubr.f32.gmra.mrb[0].mxu0 %v483
  %v553 = vpop.f32.mrb[0].mxu0
  %v554 = vadd.f32 0.0, %v553
  %v555 = vpop.f32.mrb[0].mxu0
  %556 = vdwg.mxu0
  %v557 = vmul.f32 %v554, 0.35355338
  %v558 = vsel %vm150, %v557, -inf
  %559 = vmax.xlane.f32.xlu0 %v558
  %v560 = vpop.xlane.xlu0 %559
  %v561 = vsub.f32 %v557, %v560
  %v562 = vmul.f32 %v561, 1.442695
  %v563 = vpow.pop %v562
  %v564 = vsel %vm150, %v563, 0.0
  %565 = vadd.xlane.f32.xlu0 %v564
  %v566 = vpop.xlane.xlu0 %565
  %v567 = vrcp.pop %v566
  %v568 = vmul.f32 %v563, %v567
  %569 = vrot.lane.b32.xlu0 %v144, 48
  %v570 = vpop.permute.xlu0 %569
  %v573 = vsel %vm150, %v568, 0
  %575 = vmatprep.subr.mxu0 0.0
  %576 = vmatpush1.msra.mxu0 %v570
  %577 = vmatprep.subr.mxu0 0.0
  %578 = vmatpush1.msra.mxu0 0.0
  %579 = vmatprep.subr.mxu0 0.0
  %580 = vmatpush1.msra.mxu0 0.0
  %581 = vmatprep.subr.mxu0 0.0
  %582 = vmatpush1.msra.mxu0 0.0
  %583 = vmatprep.subr.mxu0 0.0
  %584 = vmatpush1.msra.mxu0 0.0
  %585 = vmatprep.subr.mxu0 0.0
  %586 = vmatpush1.msra.mxu0 0.0
  %587 = vmatprep.subr.mxu0 0.0
  %588 = vmatpush1.msra.mxu0 0.0
  %589 = vmatprep.subr.mxu0 0.0
  %590 = vmatpush1.msra.mxu0 0.0
  %591 = vmatprep.subr.mxu0 0.0
  %592 = vmatpush1.msra.mxu0 0.0
  %593 = vmatprep.subr.mxu0 0.0
  %594 = vmatpush1.msra.mxu0 0.0
  %595 = vmatprep.subr.mxu0 0.0
  %596 = vmatpush1.msra.mxu0 0.0
  %597 = vmatprep.subr.mxu0 0.0
  %598 = vmatpush1.msra.mxu0 0.0
  %599 = vmatprep.subr.mxu0 0.0
  %600 = vmatpush1.msra.mxu0 0.0
  %601 = vmatprep.subr.mxu0 0.0
  %602 = vmatpush1.msra.mxu0 0.0
  %603 = vmatprep.subr.mxu0 0.0
  %604 = vmatpush1.msra.mxu0 0.0
  %605 = vmatprep.subr.mxu0 0.0
  %606 = vmatpush1.msra.mxu0 0.0
  %607 = vmatprep.subr.mxu0 0.0
  %608 = vmatpush1.msra.mxu0 0.0
  %609 = vmatprep.subr.mxu0 0.0
  %610 = vmatpush1.msra.mxu0 0.0
  %611 = vmatprep.subr.mxu0 0.0
  %612 = vmatpush1.msra.mxu0 0.0
  %613 = vmatprep.subr.mxu0 0.0
  %614 = vmatpush1.msra.mxu0 0.0
  %615 = vmatprep.subr.mxu0 0.0
  %616 = vmatpush1.msra.mxu0 0.0
  %617 = vmatprep.subr.mxu0 0.0
  %618 = vmatpush1.msra.mxu0 0.0
  %619 = vmatprep.subr.mxu0 0.0
  %620 = vmatpush1.msra.mxu0 0.0
  %621 = vmatprep.subr.mxu0 0.0
  %622 = vmatpush1.msra.mxu0 0.0
  %623 = vmatprep.subr.mxu0 0.0
  %624 = vmatpush1.msra.mxu0 0.0
  %625 = vmatprep.subr.mxu0 0.0
  %626 = vmatpush1.msra.mxu0 0.0
  %627 = vmatprep.subr.mxu0 0.0
  %628 = vmatpush1.msra.mxu0 0.0
  %629 = vmatprep.subr.mxu0 0.0
  %630 = vmatpush1.msra.mxu0 0.0
  %631 = vmatprep.subr.mxu0 0.0
  %632 = vmatpush1.msra.mxu0 0.0
  %633 = vmatprep.subr.mxu0 0.0
  %634 = vmatpush1.msra.mxu0 0.0
  %635 = vmatprep.subr.mxu0 0.0
  %636 = vmatpush1.msra.mxu0 0.0
  %637 = vmatprep.subr.mxu0 0.0
  %638 = vmatpush1.msra.mxu0 0.0
  %639 = vmatprep.mubr.f32.mxu0 0.0
  %640 = vmatmul.mubr.f32.gmra.mrb[0].mxu0 %v573
  %v641 = vpop.f32.mrb[0].mxu0
  %v642 = vadd.f32 0.0, %v641
  %v643 = vpop.f32.mrb[0].mxu0
  %644 = vdwg.mxu0
  %645 = vrot.lane.b32.xlu0 %v144, 104
  %v646 = vpop.permute.xlu0 %645
  %647 = vrot.lane.b32.xlu0 %v144, 72
  %v648 = vpop.permute.xlu0 %647
  %v649 = vsel %vm150, %v646, 0
  %v651 = vsel %vm150, %v648, 0
  %653 = vmatprep.subr.mxu0 0.0
  %654 = vmatpush1.xpose.msra.mxu0 %v651
  %655 = vmatprep.subr.mxu0 0.0
  %656 = vmatpush1.xpose.msra.mxu0 0.0
  %657 = vmatprep.subr.mxu0 0.0
  %658 = vmatpush1.xpose.msra.mxu0 0.0
  %659 = vmatprep.subr.mxu0 0.0
  %660 = vmatpush1.xpose.msra.mxu0 0.0
  %661 = vmatprep.subr.mxu0 0.0
  %662 = vmatpush1.xpose.msra.mxu0 0.0
  %663 = vmatprep.subr.mxu0 0.0
  %664 = vmatpush1.xpose.msra.mxu0 0.0
  %665 = vmatprep.subr.mxu0 0.0
  %666 = vmatpush1.xpose.msra.mxu0 0.0
  %667 = vmatprep.subr.mxu0 0.0
  %668 = vmatpush1.xpose.msra.mxu0 0.0
  %669 = vmatprep.subr.mxu0 0.0
  %670 = vmatpush1.xpose.msra.mxu0 0.0
  %671 = vmatprep.subr.mxu0 0.0
  %672 = vmatpush1.xpose.msra.mxu0 0.0
  %673 = vmatprep.subr.mxu0 0.0
  %674 = vmatpush1.xpose.msra.mxu0 0.0
  %675 = vmatprep.subr.mxu0 0.0
  %676 = vmatpush1.xpose.msra.mxu0 0.0
  %677 = vmatprep.subr.mxu0 0.0
  %678 = vmatpush1.xpose.msra.mxu0 0.0
  %679 = vmatprep.subr.mxu0 0.0
  %680 = vmatpush1.xpose.msra.mxu0 0.0
  %681 = vmatprep.subr.mxu0 0.0
  %682 = vmatpush1.xpose.msra.mxu0 0.0
  %683 = vmatprep.subr.mxu0 0.0
  %684 = vmatpush1.xpose.msra.mxu0 0.0
  %685 = vmatprep.subr.mxu0 0.0
  %686 = vmatpush1.xpose.msra.mxu0 0.0
  %687 = vmatprep.subr.mxu0 0.0
  %688 = vmatpush1.xpose.msra.mxu0 0.0
  %689 = vmatprep.subr.mxu0 0.0
  %690 = vmatpush1.xpose.msra.mxu0 0.0
  %691 = vmatprep.subr.mxu0 0.0
  %692 = vmatpush1.xpose.msra.mxu0 0.0
  %693 = vmatprep.subr.mxu0 0.0
  %694 = vmatpush1.xpose.msra.mxu0 0.0
  %695 = vmatprep.subr.mxu0 0.0
  %696 = vmatpush1.xpose.msra.mxu0 0.0
  %697 = vmatprep.subr.mxu0 0.0
  %698 = vmatpush1.xpose.msra.mxu0 0.0
  %699 = vmatprep.subr.mxu0 0.0
  %700 = vmatpush1.xpose.msra.mxu0 0.0
  %701 = vmatprep.subr.mxu0 0.0
  %702 = vmatpush1.xpose.msra.mxu0 0.0
  %703 = vmatprep.subr.mxu0 0.0
  %704 = vmatpush1.xpose.msra.mxu0 0.0
  %705 = vmatprep.subr.mxu0 0.0
  %706 = vmatpush1.xpose.msra.mxu0 0.0
  %707 = vmatprep.subr.mxu0 0.0
  %708 = vmatpush1.xpose.msra.mxu0 0.0
  %709 = vmatprep.subr.mxu0 0.0
  %710 = vmatpush1.xpose.msra.mxu0 0.0
  %711 = vmatprep.subr.mxu0 0.0
  %712 = vmatpush1.xpose.msra.mxu0 0.0
  %713 = vmatprep.subr.mxu0 0.0
  %714 = vmatpush1.xpose.msra.mxu0 0.0
  %715 = vmatprep.subr.mxu0 0.0
  %716 = vmatpush1.xpose.msra.mxu0 0.0
  %717 = vmatprep.mubr.f32.mxu0 0.0
  %718 = vmatmul.mubr.f32.gmra.mrb[0].mxu0 %v649
  %v719 = vpop.f32.mrb[0].mxu0
  %v720 = vadd.f32 0.0, %v719
  %v721 = vpop.f32.mrb[0].mxu0
  %722 = vdwg.mxu0
  %v723 = vmul.f32 %v720, 0.35355338
  %v724 = vsel %vm150, %v723, -inf
  %725 = vmax.xlane.f32.xlu0 %v724
  %v726 = vpop.xlane.xlu0 %725
  %v727 = vsub.f32 %v723, %v726
  %v728 = vmul.f32 %v727, 1.442695
  %v729 = vpow.pop %v728
  %v730 = vsel %vm150, %v729, 0.0
  %731 = vadd.xlane.f32.xlu0 %v730
  %v732 = vpop.xlane.xlu0 %731
  %v733 = vrcp.pop %v732
  %v734 = vmul.f32 %v729, %v733
  %735 = vrot.lane.b32.xlu0 %v144, 40
  %v736 = vpop.permute.xlu0 %735
  %v739 = vsel %vm150, %v734, 0
  %741 = vmatprep.subr.mxu0 0.0
  %742 = vmatpush1.msra.mxu0 %v736
  %743 = vmatprep.subr.mxu0 0.0
  %744 = vmatpush1.msra.mxu0 0.0
  %745 = vmatprep.subr.mxu0 0.0
  %746 = vmatpush1.msra.mxu0 0.0
  %747 = vmatprep.subr.mxu0 0.0
  %748 = vmatpush1.msra.mxu0 0.0
  %749 = vmatprep.subr.mxu0 0.0
  %750 = vmatpush1.msra.mxu0 0.0
  %751 = vmatprep.subr.mxu0 0.0
  %752 = vmatpush1.msra.mxu0 0.0
  %753 = vmatprep.subr.mxu0 0.0
  %754 = vmatpush1.msra.mxu0 0.0
  %755 = vmatprep.subr.mxu0 0.0
  %756 = vmatpush1.msra.mxu0 0.0
  %757 = vmatprep.subr.mxu0 0.0
  %758 = vmatpush1.msra.mxu0 0.0
  %759 = vmatprep.subr.mxu0 0.0
  %760 = vmatpush1.msra.mxu0 0.0
  %761 = vmatprep.subr.mxu0 0.0
  %762 = vmatpush1.msra.mxu0 0.0
  %763 = vmatprep.subr.mxu0 0.0
  %764 = vmatpush1.msra.mxu0 0.0
  %765 = vmatprep.subr.mxu0 0.0
  %766 = vmatpush1.msra.mxu0 0.0
  %767 = vmatprep.subr.mxu0 0.0
  %768 = vmatpush1.msra.mxu0 0.0
  %769 = vmatprep.subr.mxu0 0.0
  %770 = vmatpush1.msra.mxu0 0.0
  %771 = vmatprep.subr.mxu0 0.0
  %772 = vmatpush1.msra.mxu0 0.0
  %773 = vmatprep.subr.mxu0 0.0
  %774 = vmatpush1.msra.mxu0 0.0
  %775 = vmatprep.subr.mxu0 0.0
  %776 = vmatpush1.msra.mxu0 0.0
  %777 = vmatprep.subr.mxu0 0.0
  %778 = vmatpush1.msra.mxu0 0.0
  %779 = vmatprep.subr.mxu0 0.0
  %780 = vmatpush1.msra.mxu0 0.0
  %781 = vmatprep.subr.mxu0 0.0
  %782 = vmatpush1.msra.mxu0 0.0
  %783 = vmatprep.subr.mxu0 0.0
  %784 = vmatpush1.msra.mxu0 0.0
  %785 = vmatprep.subr.mxu0 0.0
  %786 = vmatpush1.msra.mxu0 0.0
  %787 = vmatprep.subr.mxu0 0.0
  %788 = vmatpush1.msra.mxu0 0.0
  %789 = vmatprep.subr.mxu0 0.0
  %790 = vmatpush1.msra.mxu0 0.0
  %791 = vmatprep.subr.mxu0 0.0
  %792 = vmatpush1.msra.mxu0 0.0
  %793 = vmatprep.subr.mxu0 0.0
  %794 = vmatpush1.msra.mxu0 0.0
  %795 = vmatprep.subr.mxu0 0.0
  %796 = vmatpush1.msra.mxu0 0.0
  %797 = vmatprep.subr.mxu0 0.0
  %798 = vmatpush1.msra.mxu0 0.0
  %799 = vmatprep.subr.mxu0 0.0
  %800 = vmatpush1.msra.mxu0 0.0
  %801 = vmatprep.subr.mxu0 0.0
  %802 = vmatpush1.msra.mxu0 0.0
  %803 = vmatprep.subr.mxu0 0.0
  %804 = vmatpush1.msra.mxu0 0.0
  %805 = vmatprep.mubr.f32.mxu0 0.0
  %806 = vmatmul.mubr.f32.gmra.mrb[0].mxu0 %v739
  %v807 = vpop.f32.mrb[0].mxu0
  %v808 = vadd.f32 0.0, %v807
  %v809 = vpop.f32.mrb[0].mxu0
  %810 = vdwg.mxu0
  %812 = vrot.lane.b32.xlu0 %v476, 8
  %v813 = vpop.permute.xlu0 %812
  %816 = vrot.lane.b32.xlu0 %v642, 16
  %v817 = vpop.permute.xlu0 %816
  %820 = vrot.lane.b32.xlu0 %v808, 24
  %v821 = vpop.permute.xlu0 %820
  %v823 = vsel %vm150, %v310, %v813
  %v824 = vsel %vm42, %v823, %v817
  %vm825 = vcmask 195584
  %v826 = vsel %vm825, %v824, %v821
  %v827 = vlaneseq
  %v828 = vshrl.u32 %v827, 7
  %v829 = vsub.s32 0, %v828
  %v830 = vrot.slane %v66, %v829
  %v832 = vsel %vm73, %v826, 0
  %834 = vmatprep.subr.mxu0 0.0
  %835 = vmatpush1.msra.mxu0 %v49
  %836 = vmatprep.subr.mxu0 0.0
  %837 = vmatpush1.msra.mxu0 %v50
  %838 = vmatprep.subr.mxu0 0.0
  %839 = vmatpush1.msra.mxu0 %v51
  %840 = vmatprep.subr.mxu0 0.0
  %841 = vmatpush1.msra.mxu0 %v52
  %842 = vmatprep.subr.mxu0 0.0
  %843 = vmatpush1.msra.mxu0 0.0
  %844 = vmatprep.subr.mxu0 0.0
  %845 = vmatpush1.msra.mxu0 0.0
  %846 = vmatprep.subr.mxu0 0.0
  %847 = vmatpush1.msra.mxu0 0.0
  %848 = vmatprep.subr.mxu0 0.0
  %849 = vmatpush1.msra.mxu0 0.0
  %850 = vmatprep.subr.mxu0 0.0
  %851 = vmatpush1.msra.mxu0 0.0
  %852 = vmatprep.subr.mxu0 0.0
  %853 = vmatpush1.msra.mxu0 0.0
  %854 = vmatprep.subr.mxu0 0.0
  %855 = vmatpush1.msra.mxu0 0.0
  %856 = vmatprep.subr.mxu0 0.0
  %857 = vmatpush1.msra.mxu0 0.0
  %858 = vmatprep.subr.mxu0 0.0
  %859 = vmatpush1.msra.mxu0 0.0
  %860 = vmatprep.subr.mxu0 0.0
  %861 = vmatpush1.msra.mxu0 0.0
  %862 = vmatprep.subr.mxu0 0.0
  %863 = vmatpush1.msra.mxu0 0.0
  %864 = vmatprep.subr.mxu0 0.0
  %865 = vmatpush1.msra.mxu0 0.0
  %866 = vmatprep.subr.mxu0 0.0
  %867 = vmatpush1.msra.mxu0 0.0
  %868 = vmatprep.subr.mxu0 0.0
  %869 = vmatpush1.msra.mxu0 0.0
  %870 = vmatprep.subr.mxu0 0.0
  %871 = vmatpush1.msra.mxu0 0.0
  %872 = vmatprep.subr.mxu0 0.0
  %873 = vmatpush1.msra.mxu0 0.0
  %874 = vmatprep.subr.mxu0 0.0
  %875 = vmatpush1.msra.mxu0 0.0
  %876 = vmatprep.subr.mxu0 0.0
  %877 = vmatpush1.msra.mxu0 0.0
  %878 = vmatprep.subr.mxu0 0.0
  %879 = vmatpush1.msra.mxu0 0.0
  %880 = vmatprep.subr.mxu0 0.0
  %881 = vmatpush1.msra.mxu0 0.0
  %882 = vmatprep.subr.mxu0 0.0
  %883 = vmatpush1.msra.mxu0 0.0
  %884 = vmatprep.subr.mxu0 0.0
  %885 = vmatpush1.msra.mxu0 0.0
  %886 = vmatprep.subr.mxu0 0.0
  %887 = vmatpush1.msra.mxu0 0.0
  %888 = vmatprep.subr.mxu0 0.0
  %889 = vmatpush1.msra.mxu0 0.0
  %890 = vmatprep.subr.mxu0 0.0
  %891 = vmatpush1.msra.mxu0 0.0
  %892 = vmatprep.subr.mxu0 0.0
  %893 = vmatpush1.msra.mxu0 0.0
  %894 = vmatprep.subr.mxu0 0.0
  %895 = vmatpush1.msra.mxu0 0.0
  %896 = vmatprep.subr.mxu0 0.0
  %897 = vmatpush1.msra.mxu0 0.0
  %898 = vmatprep.mubr.f32.mxu0 0.0
  %899 = vmatmul.mubr.f32.gmra.mrb[0].mxu0 %v832
  %v900 = vpop.f32.mrb[0].mxu0
  %v901 = vadd.f32 %v830, %v900
  %v902 = vpop.f32.mrb[0].mxu0
  %903 = vdwg.mxu0
  %v904 = vadd.f32 %v43, %v901
  %v905 = vsel %vm73, %v904, 0.0
  %906 = vadd.xlane.f32.xlu0 %v905
  %v907 = vpop.xlane.xlu0 %906
  %v908 = vrcp.pop 32.0
  %v909 = vmul.f32 %v907, %v908
  %v910 = vsub.f32 %v904, %v909
  %v911 = vmul.f32 %v910, %v910
  %v912 = vsel %vm73, %v911, 0.0
  %913 = vadd.xlane.f32.xlu0 %v912
  %v914 = vpop.xlane.xlu0 %913
  %v915 = vmul.f32 %v914, %v908
  %v916 = vadd.f32 %v915, 1e-05
  %v917 = vrsqrt.pop %v916
  %v918 = vmul.f32 %v910, %v917
  %v919 = vlaneseq
  %v920 = vshrl.u32 %v919, 7
  %v921 = vsub.s32 1, %v920
  %v922 = vrot.slane %v66, %v921
  %v923 = vmul.f32 %v918, %v922
  %v924 = vlaneseq
  %v925 = vshrl.u32 %v924, 7
  %v926 = vsub.s32 2, %v925
  %v927 = vrot.slane %v66, %v926
  %v928 = vadd.f32 %v923, %v927
  %v930 = vlaneseq
  %v931 = vshrl.u32 %v930, 7
  %v932 = vsub.s32 0, %v931
  %v933 = vrot.slane %v57, %v932
  %v936 = vsel %vm73, %v928, 0
  %938 = vmatprep.subr.mxu0 0.0
  %939 = vmatpush1.msra.mxu0 %v53
  %940 = vmatprep.subr.mxu0 0.0
  %941 = vmatpush1.msra.mxu0 %v54
  %942 = vmatprep.subr.mxu0 0.0
  %943 = vmatpush1.msra.mxu0 %v55
  %944 = vmatprep.subr.mxu0 0.0
  %945 = vmatpush1.msra.mxu0 %v56
  %946 = vmatprep.subr.mxu0 0.0
  %947 = vmatpush1.msra.mxu0 0.0
  %948 = vmatprep.subr.mxu0 0.0
  %949 = vmatpush1.msra.mxu0 0.0
  %950 = vmatprep.subr.mxu0 0.0
  %951 = vmatpush1.msra.mxu0 0.0
  %952 = vmatprep.subr.mxu0 0.0
  %953 = vmatpush1.msra.mxu0 0.0
  %954 = vmatprep.subr.mxu0 0.0
  %955 = vmatpush1.msra.mxu0 0.0
  %956 = vmatprep.subr.mxu0 0.0
  %957 = vmatpush1.msra.mxu0 0.0
  %958 = vmatprep.subr.mxu0 0.0
  %959 = vmatpush1.msra.mxu0 0.0
  %960 = vmatprep.subr.mxu0 0.0
  %961 = vmatpush1.msra.mxu0 0.0
  %962 = vmatprep.subr.mxu0 0.0
  %963 = vmatpush1.msra.mxu0 0.0
  %964 = vmatprep.subr.mxu0 0.0
  %965 = vmatpush1.msra.mxu0 0.0
  %966 = vmatprep.subr.mxu0 0.0
  %967 = vmatpush1.msra.mxu0 0.0
  %968 = vmatprep.subr.mxu0 0.0
  %969 = vmatpush1.msra.mxu0 0.0
  %970 = vmatprep.subr.mxu0 0.0
  %971 = vmatpush1.msra.mxu0 0.0
  %972 = vmatprep.subr.mxu0 0.0
  %973 = vmatpush1.msra.mxu0 0.0
  %974 = vmatprep.subr.mxu0 0.0
  %975 = vmatpush1.msra.mxu0 0.0
  %976 = vmatprep.subr.mxu0 0.0
  %977 = vmatpush1.msra.mxu0 0.0
  %978 = vmatprep.subr.mxu0 0.0
  %979 = vmatpush1.msra.mxu0 0.0
  %980 = vmatprep.subr.mxu0 0.0
  %981 = vmatpush1.msra.mxu0 0.0
  %982 = vmatprep.subr.mxu0 0.0
  %983 = vmatpush1.msra.mxu0 0.0
  %984 = vmatprep.subr.mxu0 0.0
  %985 = vmatpush1.msra.mxu0 0.0
  %986 = vmatprep.subr.mxu0 0.0
  %987 = vmatpush1.msra.mxu0 0.0
  %988 = vmatprep.subr.mxu0 0.0
  %989 = vmatpush1.msra.mxu0 0.0
  %990 = vmatprep.subr.mxu0 0.0
  %991 = vmatpush1.msra.mxu0 0.0
  %992 = vmatprep.subr.mxu0 0.0
  %993 = vmatpush1.msra.mxu0 0.0
  %994 = vmatprep.subr.mxu0 0.0
  %995 = vmatpush1.msra.mxu0 0.0
  %996 = vmatprep.subr.mxu0 0.0
  %997 = vmatpush1.msra.mxu0 0.0
  %998 = vmatprep.subr.mxu0 0.0
  %999 = vmatpush1.msra.mxu0 0.0
  %1000 = vmatprep.subr.mxu0 0.0
  %1001 = vmatpush1.msra.mxu0 0.0
  %1002 = vmatprep.mubr.f32.mxu0 0.0
  %1003 = vmatmul.mubr.f32.gmra.mrb[0].mxu0 %v936
  %v1004 = vpop.f32.mrb[0].mxu0
  %v1005 = vadd.f32 %v933, %v1004
  %v1006 = vpop.f32.mrb[0].mxu0
  %1007 = vdwg.mxu0
  %v1008 = vmax.f32 %v1005, 0.0
  %v1009 = vlaneseq
  %v1010 = vshrl.u32 %v1009, 7
  %v1011 = vsub.s32 3, %v1010
  %v1012 = vrot.slane %v66, %v1011
  %vm1013 = vcmask 523264
  %v1015 = vsel %vm1013, %v1008, 0
  %1017 = vmatprep.subr.mxu0 0.0
  %1018 = vmatpush1.msra.mxu0 %v58
  %1019 = vmatprep.subr.mxu0 0.0
  %1020 = vmatpush1.msra.mxu0 %v59
  %1021 = vmatprep.subr.mxu0 0.0
  %1022 = vmatpush1.msra.mxu0 %v60
  %1023 = vmatprep.subr.mxu0 0.0
  %1024 = vmatpush1.msra.mxu0 %v61
  %1025 = vmatprep.subr.mxu0 0.0
  %1026 = vmatpush1.msra.mxu0 %v62
  %1027 = vmatprep.subr.mxu0 0.0
  %1028 = vmatpush1.msra.mxu0 %v63
  %1029 = vmatprep.subr.mxu0 0.0
  %1030 = vmatpush1.msra.mxu0 %v64
  %1031 = vmatprep.subr.mxu0 0.0
  %1032 = vmatpush1.msra.mxu0 %v65
  %1033 = vmatprep.subr.mxu0 0.0
  %1034 = vmatpush1.msra.mxu0 0.0
  %1035 = vmatprep.subr.mxu0 0.0
  %1036 = vmatpush1.msra.mxu0 0.0
  %1037 = vmatprep.subr.mxu0 0.0
  %1038 = vmatpush1.msra.mxu0 0.0
  %1039 = vmatprep.subr.mxu0 0.0
  %1040 = vmatpush1.msra.mxu0 0.0
  %1041 = vmatprep.subr.mxu0 0.0
  %1042 = vmatpush1.msra.mxu0 0.0
  %1043 = vmatprep.subr.mxu0 0.0
  %1044 = vmatpush1.msra.mxu0 0.0
  %1045 = vmatprep.subr.mxu0 0.0
  %1046 = vmatpush1.msra.mxu0 0.0
  %1047 = vmatprep.subr.mxu0 0.0
  %1048 = vmatpush1.msra.mxu0 0.0
  %1049 = vmatprep.subr.mxu0 0.0
  %1050 = vmatpush1.msra.mxu0 0.0
  %1051 = vmatprep.subr.mxu0 0.0
  %1052 = vmatpush1.msra.mxu0 0.0
  %1053 = vmatprep.subr.mxu0 0.0
  %1054 = vmatpush1.msra.mxu0 0.0
  %1055 = vmatprep.subr.mxu0 0.0
  %1056 = vmatpush1.msra.mxu0 0.0
  %1057 = vmatprep.subr.mxu0 0.0
  %1058 = vmatpush1.msra.mxu0 0.0
  %1059 = vmatprep.subr.mxu0 0.0
  %1060 = vmatpush1.msra.mxu0 0.0
  %1061 = vmatprep.subr.mxu0 0.0
  %1062 = vmatpush1.msra.mxu0 0.0
  %1063 = vmatprep.subr.mxu0 0.0
  %1064 = vmatpush1.msra.mxu0 0.0
  %1065 = vmatprep.subr.mxu0 0.0
  %1066 = vmatpush1.msra.mxu0 0.0
  %1067 = vmatprep.subr.mxu0 0.0
  %1068 = vmatpush1.msra.mxu0 0.0
  %1069 = vmatprep.subr.mxu0 0.0
  %1070 = vmatpush1.msra.mxu0 0.0
  %1071 = vmatprep.subr.mxu0 0.0
  %1072 = vmatpush1.msra.mxu0 0.0
  %1073 = vmatprep.subr.mxu0 0.0
  %1074 = vmatpush1.msra.mxu0 0.0
  %1075 = vmatprep.subr.mxu0 0.0
  %1076 = vmatpush1.msra.mxu0 0.0
  %1077 = vmatprep.subr.mxu0 0.0
  %1078 = vmatpush1.msra.mxu0 0.0
  %1079 = vmatprep.subr.mxu0 0.0
  %1080 = vmatpush1.msra.mxu0 0.0
  %1081 = vmatprep.mubr.f32.mxu0 0.0
  %1082 = vmatmul.mubr.f32.gmra.mrb[0].mxu0 %v1015
  %v1083 = vpop.f32.mrb[0].mxu0
  %v1084 = vadd.f32 %v1012, %v1083
  %v1085 = vpop.f32.mrb[0].mxu0
  %1086 = vdwg.mxu0
  %v1087 = vadd.f32 %v928, %v1084
  %v1088 = vsel %vm73, %v1087, 0.0
  %1089 = vadd.xlane.f32.xlu0 %v1088
  %v1090 = vpop.xlane.xlu0 %1089
  %v1091 = vmul.f32 %v1090, %v908
  %v1092 = vsub.f32 %v1087, %v1091
  %v1093 = vmul.f32 %v1092, %v1092
  %v1094 = vsel %vm73, %v1093, 0.0
  %1095 = vadd.xlane.f32.xlu0 %v1094
  %v1096 = vpop.xlane.xlu0 %1095
  %v1097 = vmul.f32 %v1096, %v908
  %v1098 = vadd.f32 %v1097, 1e-05
  %v1099 = vrsqrt.pop %v1098
  %v1100 = vmul.f32 %v1092, %v1099
  %v1101 = vlaneseq
  %v1102 = vshrl.u32 %v1101, 7
  %v1103 = vsub.s32 4, %v1102
  %v1104 = vrot.slane %v66, %v1103
  %v1105 = vmul.f32 %v1100, %v1104
  %v1106 = vlaneseq
  %v1107 = vshrl.u32 %v1106, 7
  %v1108 = vsub.s32 5, %v1107
  %v1109 = vrot.slane %v66, %v1108
  %v1110 = vadd.f32 %v1105, %v1109
  %s1111 = scalar_lea.vmem %s1, 32
  %v1112 = vld [vmem:[%s1111] sm:$0xff]
  %v1113 = vld [vmem:[%s1111 + $0x8] sm:$0xff]
  %v1114 = vld [vmem:[%s1111 + $0x10] sm:$0xff]
  %v1115 = vld [vmem:[%s1111 + $0x18] sm:$0xff]
  %s1116 = scalar_lea.vmem %s2, 1
  %v1117 = vld [vmem:[%s1116] sm:$0x1]
  %s1118 = scalar_lea.vmem %s3, 32
  %v1119 = vld [vmem:[%s1118] sm:$0xff]
  %v1120 = vld [vmem:[%s1118 + $0x8] sm:$0xff]
  %v1121 = vld [vmem:[%s1118 + $0x10] sm:$0xff]
  %v1122 = vld [vmem:[%s1118 + $0x18] sm:$0xff]
  %s1123 = scalar_lea.vmem %s4, 32
  %v1124 = vld [vmem:[%s1123] sm:$0xff]
  %v1125 = vld [vmem:[%s1123 + $0x8] sm:$0xff]
  %v1126 = vld [vmem:[%s1123 + $0x10] sm:$0xff]
  %v1127 = vld [vmem:[%s1123 + $0x18] sm:$0xff]
  %s1128 = scalar_lea.vmem %s5, 1
  %v1129 = vld [vmem:[%s1128] sm:$0x1]
  %s1130 = scalar_lea.vmem %s6, 64
  %v1131 = vld [vmem:[%s1130] sm:$0xff]
  %v1132 = vld [vmem:[%s1130 + $0x8] sm:$0xff]
  %v1133 = vld [vmem:[%s1130 + $0x10] sm:$0xff]
  %v1134 = vld [vmem:[%s1130 + $0x18] sm:$0xff]
  %v1135 = vld [vmem:[%s1130 + $0x20] sm:$0xff]
  %v1136 = vld [vmem:[%s1130 + $0x28] sm:$0xff]
  %v1137 = vld [vmem:[%s1130 + $0x30] sm:$0xff]
  %v1138 = vld [vmem:[%s1130 + $0x38] sm:$0xff]
  %s1139 = scalar_lea.vmem %s7, 8
  %v1140 = vld [vmem:[%s1139] sm:$0x3f]
  %v1142 = vlaneseq
  %v1143 = vshrl.u32 %v1142, 7
  %v1144 = vsub.s32 0, %v1143
  %v1145 = vrot.slane %v1117, %v1144
  %v1148 = vsel %vm73, %v1110, 0
  %1150 = vmatprep.subr.mxu0 0.0
  %1151 = vmatpush1.msra.mxu0 %v1112
  %1152 = vmatprep.subr.mxu0 0.0
  %1153 = vmatpush1.msra.mxu0 %v1113
  %1154 = vmatprep.subr.mxu0 0.0
  %1155 = vmatpush1.msra.mxu0 %v1114
  %1156 = vmatprep.subr.mxu0 0.0
  %1157 = vmatpush1.msra.mxu0 %v1115
  %1158 = vmatprep.subr.mxu0 0.0
  %1159 = vmatpush1.msra.mxu0 0.0
  %1160 = vmatprep.subr.mxu0 0.0
  %1161 = vmatpush1.msra.mxu0 0.0
  %1162 = vmatprep.subr.mxu0 0.0
  %1163 = vmatpush1.msra.mxu0 0.0
  %1164 = vmatprep.subr.mxu0 0.0
  %1165 = vmatpush1.msra.mxu0 0.0
  %1166 = vmatprep.subr.mxu0 0.0
  %1167 = vmatpush1.msra.mxu0 0.0
  %1168 = vmatprep.subr.mxu0 0.0
  %1169 = vmatpush1.msra.mxu0 0.0
  %1170 = vmatprep.subr.mxu0 0.0
  %1171 = vmatpush1.msra.mxu0 0.0
  %1172 = vmatprep.subr.mxu0 0.0
  %1173 = vmatpush1.msra.mxu0 0.0
  %1174 = vmatprep.subr.mxu0 0.0
  %1175 = vmatpush1.msra.mxu0 0.0
  %1176 = vmatprep.subr.mxu0 0.0
  %1177 = vmatpush1.msra.mxu0 0.0
  %1178 = vmatprep.subr.mxu0 0.0
  %1179 = vmatpush1.msra.mxu0 0.0
  %1180 = vmatprep.subr.mxu0 0.0
  %1181 = vmatpush1.msra.mxu0 0.0
  %1182 = vmatprep.subr.mxu0 0.0
  %1183 = vmatpush1.msra.mxu0 0.0
  %1184 = vmatprep.subr.mxu0 0.0
  %1185 = vmatpush1.msra.mxu0 0.0
  %1186 = vmatprep.subr.mxu0 0.0
  %1187 = vmatpush1.msra.mxu0 0.0
  %1188 = vmatprep.subr.mxu0 0.0
  %1189 = vmatpush1.msra.mxu0 0.0
  %1190 = vmatprep.subr.mxu0 0.0
  %1191 = vmatpush1.msra.mxu0 0.0
  %1192 = vmatprep.subr.mxu0 0.0
  %1193 = vmatpush1.msra.mxu0 0.0
  %1194 = vmatprep.subr.mxu0 0.0
  %1195 = vmatpush1.msra.mxu0 0.0
  %1196 = vmatprep.subr.mxu0 0.0
  %1197 = vmatpush1.msra.mxu0 0.0
  %1198 = vmatprep.subr.mxu0 0.0
  %1199 = vmatpush1.msra.mxu0 0.0
  %1200 = vmatprep.subr.mxu0 0.0
  %1201 = vmatpush1.msra.mxu0 0.0
  %1202 = vmatprep.subr.mxu0 0.0
  %1203 = vmatpush1.msra.mxu0 0.0
  %1204 = vmatprep.subr.mxu0 0.0
  %1205 = vmatpush1.msra.mxu0 0.0
  %1206 = vmatprep.subr.mxu0 0.0
  %1207 = vmatpush1.msra.mxu0 0.0
  %1208 = vmatprep.subr.mxu0 0.0
  %1209 = vmatpush1.msra.mxu0 0.0
  %1210 = vmatprep.subr.mxu0 0.0
  %1211 = vmatpush1.msra.mxu0 0.0
  %1212 = vmatprep.subr.mxu0 0.0
  %1213 = vmatpush1.msra.mxu0 0.0
  %1214 = vmatprep.mubr.f32.mxu0 0.0
  %1215 = vmatmul.mubr.f32.gmra.mrb[0].mxu0 %v1148
  %v1216 = vpop.f32.mrb[0].mxu0
  %v1217 = vadd.f32 %v1145, %v1216
  %v1218 = vpop.f32.mrb[0].mxu0
  %1219 = vdwg.mxu0
  %1221 = vrot.lane.b32.xlu0 %v1217, 96
  %v1222 = vpop.permute.xlu0 %1221
  %v1223 = vsel %vm150, %v1217, 0
  %v1225 = vsel %vm150, %v1222, 0
  %1227 = vmatprep.subr.mxu0 0.0
  %1228 = vmatpush1.xpose.msra.mxu0 %v1225
  %1229 = vmatprep.subr.mxu0 0.0
  %1230 = vmatpush1.xpose.msra.mxu0 0.0
  %1231 = vmatprep.subr.mxu0 0.0
  %1232 = vmatpush1.xpose.msra.mxu0 0.0
  %1233 = vmatprep.subr.mxu0 0.0
  %1234 = vmatpush1.xpose.msra.mxu0 0.0
  %1235 = vmatprep.subr.mxu0 0.0
  %1236 = vmatpush1.xpose.msra.mxu0 0.0
  %1237 = vmatprep.subr.mxu0 0.0
  %1238 = vmatpush1.xpose.msra.mxu0 0.0
  %1239 = vmatprep.subr.mxu0 0.0
  %1240 = vmatpush1.xpose.msra.mxu0 0.0
  %1241 = vmatprep.subr.mxu0 0.0
  %1242 = vmatpush1.xpose.msra.mxu0 0.0
  %1243 = vmatprep.subr.mxu0 0.0
  %1244 = vmatpush1.xpose.msra.mxu0 0.0
  %1245 = vmatprep.subr.mxu0 0.0
  %1246 = vmatpush1.xpose.msra.mxu0 0.0
  %1247 = vmatprep.subr.mxu0 0.0
  %1248 = vmatpush1.xpose.msra.mxu0 0.0
  %1249 = vmatprep.subr.mxu0 0.0
  %1250 = vmatpush1.xpose.msra.mxu0 0.0
  %1251 = vmatprep.subr.mxu0 0.0
  %1252 = vmatpush1.xpose.msra.mxu0 0.0
  %1253 = vmatprep.subr.mxu0 0.0
  %1254 = vmatpush1.xpose.msra.mxu0 0.0
  %1255 = vmatprep.subr.mxu0 0.0
  %1256 = vmatpush1.xpose.msra.mxu0 0.0
  %1257 = vmatprep.subr.mxu0 0.0
  %1258 = vmatpush1.xpose.msra.mxu0 0.0
  %1259 = vmatprep.subr.mxu0 0.0
  %1260 = vmatpush1.xpose.msra.mxu0 0.0
  %1261 = vmatprep.subr.mxu0 0.0
  %1262 = vmatpush1.xpose.msra.mxu0 0.0
  %1263 = vmatprep.subr.mxu0 0.0
  %1264 = vmatpush1.xpose.msra.mxu0 0.0
  %1265 = vmatprep.subr.mxu0 0.0
  %1266 = vmatpush1.xpose.msra.mxu0 0.0
  %1267 = vmatprep.subr.mxu0 0.0
  %1268 = vmatpush1.xpose.msra.mxu0 0.0
  %1269 = vmatprep.subr.mxu0 0.0
  %1270 = vmatpush1.xpose.msra.mxu0 0.0
  %1271 = vmatprep.subr.mxu0 0.0
  %1272 = vmatpush1.xpose.msra.mxu0 0.0
  %1273 = vmatprep.subr.mxu0 0.0
  %1274 = vmatpush1.xpose.msra.mxu0 0.0
  %1275 = vmatprep.subr.mxu0 0.0
  %1276 = vmatpush1.xpose.msra.mxu0 0.0
  %1277 = vmatprep.subr.mxu0 0.0
  %1278 = vmatpush1.xpose.msra.mxu0 0.0
  %1279 = vmatprep.subr.mxu0 0.0
  %1280 = vmatpush1.xpose.msra.mxu0 0.0
  %1281 = vmatprep.subr.mxu0 0.0
  %1282 = vmatpush1.xpose.msra.mxu0 0.0
  %1283 = vmatprep.subr.mxu0 0.0
  %1284 = vmatpush1.xpose.msra.mxu0 0.0
  %1285 = vmatprep.subr.mxu0 0.0
  %1286 = vmatpush1.xpose.msra.mxu0 0.0
  %1287 = vmatprep.subr.mxu0 0.0
  %1288 = vmatpush1.xpose.msra.mxu0 0.0
  %1289 = vmatprep.subr.mxu0 0.0
  %1290 = vmatpush1.xpose.msra.mxu0 0.0
  %1291 = vmatprep.mubr.f32.mxu0 0.0
  %1292 = vmatmul.mubr.f32.gmra.mrb[0].mxu0 %v1223
  %v1293 = vpop.f32.mrb[0].mxu0
  %v1294 = vadd.f32 0.0, %v1293
  %v1295 = vpop.f32.mrb[0].mxu0
  %1296 = vdwg.mxu0
  %v1297 = vmul.f32 %v1294, 0.35355338
  %v1298 = vsel %vm150, %v1297, -inf
  %1299 = vmax.xlane.f32.xlu0 %v1298
  %v1300 = vpop.xlane.xlu0 %1299
  %v1301 = vsub.f32 %v1297, %v1300
  %v1302 = vmul.f32 %v1301, 1.442695
  %v1303 = vpow.pop %v1302
  %v1304 = vsel %vm150, %v1303, 0.0
  %1305 = vadd.xlane.f32.xlu0 %v1304
  %v1306 = vpop.xlane.xlu0 %1305
  %v1307 = vrcp.pop %v1306
  %v1308 = vmul.f32 %v1303, %v1307
  %1309 = vrot.lane.b32.xlu0 %v1217, 64
  %v1310 = vpop.permute.xlu0 %1309
  %v1313 = vsel %vm150, %v1308, 0
  %1315 = vmatprep.subr.mxu0 0.0
  %1316 = vmatpush1.msra.mxu0 %v1310
  %1317 = vmatprep.subr.mxu0 0.0
  %1318 = vmatpush1.msra.mxu0 0.0
  %1319 = vmatprep.subr.mxu0 0.0
  %1320 = vmatpush1.msra.mxu0 0.0
  %1321 = vmatprep.subr.mxu0 0.0
  %1322 = vmatpush1.msra.mxu0 0.0
  %1323 = vmatprep.subr.mxu0 0.0
  %1324 = vmatpush1.msra.mxu0 0.0
  %1325 = vmatprep.subr.mxu0 0.0
  %1326 = vmatpush1.msra.mxu0 0.0
  %1327 = vmatprep.subr.mxu0 0.0
  %1328 = vmatpush1.msra.mxu0 0.0
  %1329 = vmatprep.subr.mxu0 0.0
  %1330 = vmatpush1.msra.mxu0 0.0
  %1331 = vmatprep.subr.mxu0 0.0
  %1332 = vmatpush1.msra.mxu0 0.0
  %1333 = vmatprep.subr.mxu0 0.0
  %1334 = vmatpush1.msra.mxu0 0.0
  %1335 = vmatprep.subr.mxu0 0.0
  %1336 = vmatpush1.msra.mxu0 0.0
  %1337 = vmatprep.subr.mxu0 0.0
  %1338 = vmatpush1.msra.mxu0 0.0
  %1339 = vmatprep.subr.mxu0 0.0
  %1340 = vmatpush1.msra.mxu0 0.0
  %1341 = vmatprep.subr.mxu0 0.0
  %1342 = vmatpush1.msra.mxu0 0.0
  %1343 = vmatprep.subr.mxu0 0.0
  %1344 = vmatpush1.msra.mxu0 0.0
  %1345 = vmatprep.subr.mxu0 0.0
  %1346 = vmatpush1.msra.mxu0 0.0
  %1347 = vmatprep.subr.mxu0 0.0
  %1348 = vmatpush1.msra.mxu0 0.0
  %1349 = vmatprep.subr.mxu0 0.0
  %1350 = vmatpush1.msra.mxu0 0.0
  %1351 = vmatprep.subr.mxu0 0.0
  %1352 = vmatpush1.msra.mxu0 0.0
  %1353 = vmatprep.subr.mxu0 0.0
  %1354 = vmatpush1.msra.mxu0 0.0
  %1355 = vmatprep.subr.mxu0 0.0
  %1356 = vmatpush1.msra.mxu0 0.0
  %1357 = vmatprep.subr.mxu0 0.0
  %1358 = vmatpush1.msra.mxu0 0.0
  %1359 = vmatprep.subr.mxu0 0.0
  %1360 = vmatpush1.msra.mxu0 0.0
  %1361 = vmatprep.subr.mxu0 0.0
  %1362 = vmatpush1.msra.mxu0 0.0
  %1363 = vmatprep.subr.mxu0 0.0
  %1364 = vmatpush1.msra.mxu0 0.0
  %1365 = vmatprep.subr.mxu0 0.0
  %1366 = vmatpush1.msra.mxu0 0.0
  %1367 = vmatprep.subr.mxu0 0.0
  %1368 = vmatpush1.msra.mxu0 0.0
  %1369 = vmatprep.subr.mxu0 0.0
  %1370 = vmatpush1.msra.mxu0 0.0
  %1371 = vmatprep.subr.mxu0 0.0
  %1372 = vmatpush1.msra.mxu0 0.0
  %1373 = vmatprep.subr.mxu0 0.0
  %1374 = vmatpush1.msra.mxu0 0.0
  %1375 = vmatprep.subr.mxu0 0.0
  %1376 = vmatpush1.msra.mxu0 0.0
  %1377 = vmatprep.subr.mxu0 0.0
  %1378 = vmatpush1.msra.mxu0 0.0
  %1379 = vmatprep.mubr.f32.mxu0 0.0
  %1380 = vmatmul.mubr.f32.gmra.mrb[0].mxu0 %v1313
  %v1381 = vpop.f32.mrb[0].mxu0
  %v1382 = vadd.f32 0.0, %v1381
  %v1383 = vpop.f32.mrb[0].mxu0
  %1384 = vdwg.mxu0
  %1385 = vrot.lane.b32.xlu0 %v1217, 120
  %v1386 = vpop.permute.xlu0 %1385
  %1387 = vrot.lane.b32.xlu0 %v1217, 88
  %v1388 = vpop.permute.xlu0 %1387
  %v1389 = vsel %vm150, %v1386, 0
  %v1391 = vsel %vm150, %v1388, 0
  %1393 = vmatprep.subr.mxu0 0.0
  %1394 = vmatpush1.xpose.msra.mxu0 %v1391
  %1395 = vmatprep.subr.mxu0 0.0
  %1396 = vmatpush1.xpose.msra.mxu0 0.0
  %1397 = vmatprep.subr.mxu0 0.0
  %1398 = vmatpush1.xpose.msra.mxu0 0.0
  %1399 = vmatprep.subr.mxu0 0.0
  %1400 = vmatpush1.xpose.msra.mxu0 0.0
  %1401 = vmatprep.subr.mxu0 0.0
  %1402 = vmatpush1.xpose.msra.mxu0 0.0
  %1403 = vmatprep.subr.mxu0 0.0
  %1404 = vmatpush1.xpose.msra.mxu0 0.0
  %1405 = vmatprep.subr.mxu0 0.0
  %1406 = vmatpush1.xpose.msra.mxu0 0.0
  %1407 = vmatprep.subr.mxu0 0.0
  %1408 = vmatpush1.xpose.msra.mxu0 0.0
  %1409 = vmatprep.subr.mxu0 0.0
  %1410 = vmatpush1.xpose.msra.mxu0 0.0
  %1411 = vmatprep.subr.mxu0 0.0
  %1412 = vmatpush1.xpose.msra.mxu0 0.0
  %1413 = vmatprep.subr.mxu0 0.0
  %1414 = vmatpush1.xpose.msra.mxu0 0.0
  %1415 = vmatprep.subr.mxu0 0.0
  %1416 = vmatpush1.xpose.msra.mxu0 0.0
  %1417 = vmatprep.subr.mxu0 0.0
  %1418 = vmatpush1.xpose.msra.mxu0 0.0
  %1419 = vmatprep.subr.mxu0 0.0
  %1420 = vmatpush1.xpose.msra.mxu0 0.0
  %1421 = vmatprep.subr.mxu0 0.0
  %1422 = vmatpush1.xpose.msra.mxu0 0.0
  %1423 = vmatprep.subr.mxu0 0.0
  %1424 = vmatpush1.xpose.msra.mxu0 0.0
  %1425 = vmatprep.subr.mxu0 0.0
  %1426 = vmatpush1.xpose.msra.mxu0 0.0
  %1427 = vmatprep.subr.mxu0 0.0
  %1428 = vmatpush1.xpose.msra.mxu0 0.0
  %1429 = vmatprep.subr.mxu0 0.0
  %1430 = vmatpush1.xpose.msra.mxu0 0.0
  %1431 = vmatprep.subr.mxu0 0.0
  %1432 = vmatpush1.xpose.msra.mxu0 0.0
  %1433 = vmatprep.subr.mxu0 0.0
  %1434 = vmatpush1.xpose.msra.mxu0 0.0
  %1435 = vmatprep.subr.mxu0 0.0
  %1436 = vmatpush1.xpose.msra.mxu0 0.0
  %1437 = vmatprep.subr.mxu0 0.0
  %1438 = vmatpush1.xpose.msra.mxu0 0.0
  %1439 = vmatprep.subr.mxu0 0.0
  %1440 = vmatpush1.xpose.msra.mxu0 0.0
  %1441 = vmatprep.subr.mxu0 0.0
  %1442 = vmatpush1.xpose.msra.mxu0 0.0
  %1443 = vmatprep.subr.mxu0 0.0
  %1444 = vmatpush1.xpose.msra.mxu0 0.0
  %1445 = vmatprep.subr.mxu0 0.0
  %1446 = vmatpush1.xpose.msra.mxu0 0.0
  %1447 = vmatprep.subr.mxu0 0.0
  %1448 = vmatpush1.xpose.msra.mxu0 0.0
  %1449 = vmatprep.subr.mxu0 0.0
  %1450 = vmatpush1.xpose.msra.mxu0 0.0
  %1451 = vmatprep.subr.mxu0 0.0
  %1452 = vmatpush1.xpose.msra.mxu0 0.0
  %1453 = vmatprep.subr.mxu0 0.0
  %1454 = vmatpush1.xpose.msra.mxu0 0.0
  %1455 = vmatprep.subr.mxu0 0.0
  %1456 = vmatpush1.xpose.msra.mxu0 0.0
  %1457 = vmatprep.mubr.f32.mxu0 0.0
  %1458 = vmatmul.mubr.f32.gmra.mrb[0].mxu0 %v1389
  %v1459 = vpop.f32.mrb[0].mxu0
  %v1460 = vadd.f32 0.0, %v1459
  %v1461 = vpop.f32.mrb[0].mxu0
  %1462 = vdwg.mxu0
  %v1463 = vmul.f32 %v1460, 0.35355338
  %v1464 = vsel %vm150, %v1463, -inf
  %1465 = vmax.xlane.f32.xlu0 %v1464
  %v1466 = vpop.xlane.xlu0 %1465
  %v1467 = vsub.f32 %v1463, %v1466
  %v1468 = vmul.f32 %v1467, 1.442695
  %v1469 = vpow.pop %v1468
  %v1470 = vsel %vm150, %v1469, 0.0
  %1471 = vadd.xlane.f32.xlu0 %v1470
  %v1472 = vpop.xlane.xlu0 %1471
  %v1473 = vrcp.pop %v1472
  %v1474 = vmul.f32 %v1469, %v1473
  %1475 = vrot.lane.b32.xlu0 %v1217, 56
  %v1476 = vpop.permute.xlu0 %1475
  %v1479 = vsel %vm150, %v1474, 0
  %1481 = vmatprep.subr.mxu0 0.0
  %1482 = vmatpush1.msra.mxu0 %v1476
  %1483 = vmatprep.subr.mxu0 0.0
  %1484 = vmatpush1.msra.mxu0 0.0
  %1485 = vmatprep.subr.mxu0 0.0
  %1486 = vmatpush1.msra.mxu0 0.0
  %1487 = vmatprep.subr.mxu0 0.0
  %1488 = vmatpush1.msra.mxu0 0.0
  %1489 = vmatprep.subr.mxu0 0.0
  %1490 = vmatpush1.msra.mxu0 0.0
  %1491 = vmatprep.subr.mxu0 0.0
  %1492 = vmatpush1.msra.mxu0 0.0
  %1493 = vmatprep.subr.mxu0 0.0
  %1494 = vmatpush1.msra.mxu0 0.0
  %1495 = vmatprep.subr.mxu0 0.0
  %1496 = vmatpush1.msra.mxu0 0.0
  %1497 = vmatprep.subr.mxu0 0.0
  %1498 = vmatpush1.msra.mxu0 0.0
  %1499 = vmatprep.subr.mxu0 0.0
  %1500 = vmatpush1.msra.mxu0 0.0
  %1501 = vmatprep.subr.mxu0 0.0
  %1502 = vmatpush1.msra.mxu0 0.0
  %1503 = vmatprep.subr.mxu0 0.0
  %1504 = vmatpush1.msra.mxu0 0.0
  %1505 = vmatprep.subr.mxu0 0.0
  %1506 = vmatpush1.msra.mxu0 0.0
  %1507 = vmatprep.subr.mxu0 0.0
  %1508 = vmatpush1.msra.mxu0 0.0
  %1509 = vmatprep.subr.mxu0 0.0
  %1510 = vmatpush1.msra.mxu0 0.0
  %1511 = vmatprep.subr.mxu0 0.0
  %1512 = vmatpush1.msra.mxu0 0.0
  %1513 = vmatprep.subr.mxu0 0.0
  %1514 = vmatpush1.msra.mxu0 0.0
  %1515 = vmatprep.subr.mxu0 0.0
  %1516 = vmatpush1.msra.mxu0 0.0
  %1517 = vmatprep.subr.mxu0 0.0
  %1518 = vmatpush1.msra.mxu0 0.0
  %1519 = vmatprep.subr.mxu0 0.0
  %1520 = vmatpush1.msra.mxu0 0.0
  %1521 = vmatprep.subr.mxu0 0.0
  %1522 = vmatpush1.msra.mxu0 0.0
  %1523 = vmatprep.subr.mxu0 0.0
  %1524 = vmatpush1.msra.mxu0 0.0
  %1525 = vmatprep.subr.mxu0 0.0
  %1526 = vmatpush1.msra.mxu0 0.0
  %1527 = vmatprep.subr.mxu0 0.0
  %1528 = vmatpush1.msra.mxu0 0.0
  %1529 = vmatprep.subr.mxu0 0.0
  %1530 = vmatpush1.msra.mxu0 0.0
  %1531 = vmatprep.subr.mxu0 0.0
  %1532 = vmatpush1.msra.mxu0 0.0
  %1533 = vmatprep.subr.mxu0 0.0
  %1534 = vmatpush1.msra.mxu0 0.0
  %1535 = vmatprep.subr.mxu0 0.0
  %1536 = vmatpush1.msra.mxu0 0.0
  %1537 = vmatprep.subr.mxu0 0.0
  %1538 = vmatpush1.msra.mxu0 0.0
  %1539 = vmatprep.subr.mxu0 0.0
  %1540 = vmatpush1.msra.mxu0 0.0
  %1541 = vmatprep.subr.mxu0 0.0
  %1542 = vmatpush1.msra.mxu0 0.0
  %1543 = vmatprep.subr.mxu0 0.0
  %1544 = vmatpush1.msra.mxu0 0.0
  %1545 = vmatprep.mubr.f32.mxu0 0.0
  %1546 = vmatmul.mubr.f32.gmra.mrb[0].mxu0 %v1479
  %v1547 = vpop.f32.mrb[0].mxu0
  %v1548 = vadd.f32 0.0, %v1547
  %v1549 = vpop.f32.mrb[0].mxu0
  %1550 = vdwg.mxu0
  %1551 = vrot.lane.b32.xlu0 %v1217, 112
  %v1552 = vpop.permute.xlu0 %1551
  %1553 = vrot.lane.b32.xlu0 %v1217, 80
  %v1554 = vpop.permute.xlu0 %1553
  %v1555 = vsel %vm150, %v1552, 0
  %v1557 = vsel %vm150, %v1554, 0
  %1559 = vmatprep.subr.mxu0 0.0
  %1560 = vmatpush1.xpose.msra.mxu0 %v1557
  %1561 = vmatprep.subr.mxu0 0.0
  %1562 = vmatpush1.xpose.msra.mxu0 0.0
  %1563 = vmatprep.subr.mxu0 0.0
  %1564 = vmatpush1.xpose.msra.mxu0 0.0
  %1565 = vmatprep.subr.mxu0 0.0
  %1566 = vmatpush1.xpose.msra.mxu0 0.0
  %1567 = vmatprep.subr.mxu0 0.0
  %1568 = vmatpush1.xpose.msra.mxu0 0.0
  %1569 = vmatprep.subr.mxu0 0.0
  %1570 = vmatpush1.xpose.msra.mxu0 0.0
  %1571 = vmatprep.subr.mxu0 0.0
  %1572 = vmatpush1.xpose.msra.mxu0 0.0
  %1573 = vmatprep.subr.mxu0 0.0
  %1574 = vmatpush1.xpose.msra.mxu0 0.0
  %1575 = vmatprep.subr.mxu0 0.0
  %1576 = vmatpush1.xpose.msra.mxu0 0.0
  %1577 = vmatprep.subr.mxu0 0.0
  %1578 = vmatpush1.xpose.msra.mxu0 0.0
  %1579 = vmatprep.subr.mxu0 0.0
  %1580 = vmatpush1.xpose.msra.mxu0 0.0
  %1581 = vmatprep.subr.mxu0 0.0
  %1582 = vmatpush1.xpose.msra.mxu0 0.0
  %1583 = vmatprep.subr.mxu0 0.0
  %1584 = vmatpush1.xpose.msra.mxu0 0.0
  %1585 = vmatprep.subr.mxu0 0.0
  %1586 = vmatpush1.xpose.msra.mxu0 0.0
  %1587 = vmatprep.subr.mxu0 0.0
  %1588 = vmatpush1.xpose.msra.mxu0 0.0
  %1589 = vmatprep.subr.mxu0 0.0
  %1590 = vmatpush1.xpose.msra.mxu0 0.0
  %1591 = vmatprep.subr.mxu0 0.0
  %1592 = vmatpush1.xpose.msra.mxu0 0.0
  %1593 = vmatprep.subr.mxu0 0.0
  %1594 = vmatpush1.xpose.msra.mxu0 0.0
  %1595 = vmatprep.subr.mxu0 0.0
  %1596 = vmatpush1.xpose.msra.mxu0 0.0
  %1597 = vmatprep.subr.mxu0 0.0
  %1598 = vmatpush1.xpose.msra.mxu0 0.0
  %1599 = vmatprep.subr.mxu0 0.0
  %1600 = vmatpush1.xpose.msra.mxu0 0.0
  %1601 = vmatprep.subr.mxu0 0.0
  %1602 = vmatpush1.xpose.msra.mxu0 0.0
  %1603 = vmatprep.subr.mxu0 0.0
  %1604 = vmatpush1.xpose.msra.mxu0 0.0
  %1605 = vmatprep.subr.mxu0 0.0
  %1606 = vmatpush1.xpose.msra.mxu0 0.0
  %1607 = vmatprep.subr.mxu0 0.0
  %1608 = vmatpush1.xpose.msra.mxu0 0.0
  %1609 = vmatprep.subr.mxu0 0.0
  %1610 = vmatpush1.xpose.msra.mxu0 0.0
  %1611 = vmatprep.subr.mxu0 0.0
  %1612 = vmatpush1.xpose.msra.mxu0 0.0
  %1613 = vmatprep.subr.mxu0 0.0
  %1614 = vmatpush1.xpose.msra.mxu0 0.0
  %1615 = vmatprep.subr.mxu0 0.0
  %1616 = vmatpush1.xpose.msra.mxu0 0.0
  %1617 = vmatprep.subr.mxu0 0.0
  %1618 = vmatpush1.xpose.msra.mxu0 0.0
  %1619 = vmatprep.subr.mxu0 0.0
  %1620 = vmatpush1.xpose.msra.mxu0 0.0
  %1621 = vmatprep.subr.mxu0 0.0
  %1622 = vmatpush1.xpose.msra.mxu0 0.0
  %1623 = vmatprep.mubr.f32.mxu0 0.0
  %1624 = vmatmul.mubr.f32.gmra.mrb[0].mxu0 %v1555
  %v1625 = vpop.f32.mrb[0].mxu0
  %v1626 = vadd.f32 0.0, %v1625
  %v1627 = vpop.f32.mrb[0].mxu0
  %1628 = vdwg.mxu0
  %v1629 = vmul.f32 %v1626, 0.35355338
  %v1630 = vsel %vm150, %v1629, -inf
  %1631 = vmax.xlane.f32.xlu0 %v1630
  %v1632 = vpop.xlane.xlu0 %1631
  %v1633 = vsub.f32 %v1629, %v1632
  %v1634 = vmul.f32 %v1633, 1.442695
  %v1635 = vpow.pop %v1634
  %v1636 = vsel %vm150, %v1635, 0.0
  %1637 = vadd.xlane.f32.xlu0 %v1636
  %v1638 = vpop.xlane.xlu0 %1637
  %v1639 = vrcp.pop %v1638
  %v1640 = vmul.f32 %v1635, %v1639
  %1641 = vrot.lane.b32.xlu0 %v1217, 48
  %v1642 = vpop.permute.xlu0 %1641
  %v1645 = vsel %vm150, %v1640, 0
  %1647 = vmatprep.subr.mxu0 0.0
  %1648 = vmatpush1.msra.mxu0 %v1642
  %1649 = vmatprep.subr.mxu0 0.0
  %1650 = vmatpush1.msra.mxu0 0.0
  %1651 = vmatprep.subr.mxu0 0.0
  %1652 = vmatpush1.msra.mxu0 0.0
  %1653 = vmatprep.subr.mxu0 0.0
  %1654 = vmatpush1.msra.mxu0 0.0
  %1655 = vmatprep.subr.mxu0 0.0
  %1656 = vmatpush1.msra.mxu0 0.0
  %1657 = vmatprep.subr.mxu0 0.0
  %1658 = vmatpush1.msra.mxu0 0.0
  %1659 = vmatprep.subr.mxu0 0.0
  %1660 = vmatpush1.msra.mxu0 0.0
  %1661 = vmatprep.subr.mxu0 0.0
  %1662 = vmatpush1.msra.mxu0 0.0
  %1663 = vmatprep.subr.mxu0 0.0
  %1664 = vmatpush1.msra.mxu0 0.0
  %1665 = vmatprep.subr.mxu0 0.0
  %1666 = vmatpush1.msra.mxu0 0.0
  %1667 = vmatprep.subr.mxu0 0.0
  %1668 = vmatpush1.msra.mxu0 0.0
  %1669 = vmatprep.subr.mxu0 0.0
  %1670 = vmatpush1.msra.mxu0 0.0
  %1671 = vmatprep.subr.mxu0 0.0
  %1672 = vmatpush1.msra.mxu0 0.0
  %1673 = vmatprep.subr.mxu0 0.0
  %1674 = vmatpush1.msra.mxu0 0.0
  %1675 = vmatprep.subr.mxu0 0.0
  %1676 = vmatpush1.msra.mxu0 0.0
  %1677 = vmatprep.subr.mxu0 0.0
  %1678 = vmatpush1.msra.mxu0 0.0
  %1679 = vmatprep.subr.mxu0 0.0
  %1680 = vmatpush1.msra.mxu0 0.0
  %1681 = vmatprep.subr.mxu0 0.0
  %1682 = vmatpush1.msra.mxu0 0.0
  %1683 = vmatprep.subr.mxu0 0.0
  %1684 = vmatpush1.msra.mxu0 0.0
  %1685 = vmatprep.subr.mxu0 0.0
  %1686 = vmatpush1.msra.mxu0 0.0
  %1687 = vmatprep.subr.mxu0 0.0
  %1688 = vmatpush1.msra.mxu0 0.0
  %1689 = vmatprep.subr.mxu0 0.0
  %1690 = vmatpush1.msra.mxu0 0.0
  %1691 = vmatprep.subr.mxu0 0.0
  %1692 = vmatpush1.msra.mxu0 0.0
  %1693 = vmatprep.subr.mxu0 0.0
  %1694 = vmatpush1.msra.mxu0 0.0
  %1695 = vmatprep.subr.mxu0 0.0
  %1696 = vmatpush1.msra.mxu0 0.0
  %1697 = vmatprep.subr.mxu0 0.0
  %1698 = vmatpush1.msra.mxu0 0.0
  %1699 = vmatprep.subr.mxu0 0.0
  %1700 = vmatpush1.msra.mxu0 0.0
  %1701 = vmatprep.subr.mxu0 0.0
  %1702 = vmatpush1.msra.mxu0 0.0
  %1703 = vmatprep.subr.mxu0 0.0
  %1704 = vmatpush1.msra.mxu0 0.0
  %1705 = vmatprep.subr.mxu0 0.0
  %1706 = vmatpush1.msra.mxu0 0.0
  %1707 = vmatprep.subr.mxu0 0.0
  %1708 = vmatpush1.msra.mxu0 0.0
  %1709 = vmatprep.subr.mxu0 0.0
  %1710 = vmatpush1.msra.mxu0 0.0
  %1711 = vmatprep.mubr.f32.mxu0 0.0
  %1712 = vmatmul.mubr.f32.gmra.mrb[0].mxu0 %v1645
  %v1713 = vpop.f32.mrb[0].mxu0
  %v1714 = vadd.f32 0.0, %v1713
  %v1715 = vpop.f32.mrb[0].mxu0
  %1716 = vdwg.mxu0
  %1717 = vrot.lane.b32.xlu0 %v1217, 104
  %v1718 = vpop.permute.xlu0 %1717
  %1719 = vrot.lane.b32.xlu0 %v1217, 72
  %v1720 = vpop.permute.xlu0 %1719
  %v1721 = vsel %vm150, %v1718, 0
  %v1723 = vsel %vm150, %v1720, 0
  %1725 = vmatprep.subr.mxu0 0.0
  %1726 = vmatpush1.xpose.msra.mxu0 %v1723
  %1727 = vmatprep.subr.mxu0 0.0
  %1728 = vmatpush1.xpose.msra.mxu0 0.0
  %1729 = vmatprep.subr.mxu0 0.0
  %1730 = vmatpush1.xpose.msra.mxu0 0.0
  %1731 = vmatprep.subr.mxu0 0.0
  %1732 = vmatpush1.xpose.msra.mxu0 0.0
  %1733 = vmatprep.subr.mxu0 0.0
  %1734 = vmatpush1.xpose.msra.mxu0 0.0
  %1735 = vmatprep.subr.mxu0 0.0
  %1736 = vmatpush1.xpose.msra.mxu0 0.0
  %1737 = vmatprep.subr.mxu0 0.0
  %1738 = vmatpush1.xpose.msra.mxu0 0.0
  %1739 = vmatprep.subr.mxu0 0.0
  %1740 = vmatpush1.xpose.msra.mxu0 0.0
  %1741 = vmatprep.subr.mxu0 0.0
  %1742 = vmatpush1.xpose.msra.mxu0 0.0
  %1743 = vmatprep.subr.mxu0 0.0
  %1744 = vmatpush1.xpose.msra.mxu0 0.0
  %1745 = vmatprep.subr.mxu0 0.0
  %1746 = vmatpush1.xpose.msra.mxu0 0.0
  %1747 = vmatprep.subr.mxu0 0.0
  %1748 = vmatpush1.xpose.msra.mxu0 0.0
  %1749 = vmatprep.subr.mxu0 0.0
  %1750 = vmatpush1.xpose.msra.mxu0 0.0
  %1751 = vmatprep.subr.mxu0 0.0
  %1752 = vmatpush1.xpose.msra.mxu0 0.0
  %1753 = vmatprep.subr.mxu0 0.0
  %1754 = vmatpush1.xpose.msra.mxu0 0.0
  %1755 = vmatprep.subr.mxu0 0.0
  %1756 = vmatpush1.xpose.msra.mxu0 0.0
  %1757 = vmatprep.subr.mxu0 0.0
  %1758 = vmatpush1.xpose.msra.mxu0 0.0
  %1759 = vmatprep.subr.mxu0 0.0
  %1760 = vmatpush1.xpose.msra.mxu0 0.0
  %1761 = vmatprep.subr.mxu0 0.0
  %1762 = vmatpush1.xpose.msra.mxu0 0.0
  %1763 = vmatprep.subr.mxu0 0.0
  %1764 = vmatpush1.xpose.msra.mxu0 0.0
  %1765 = vmatprep.subr.mxu0 0.0
  %1766 = vmatpush1.xpose.msra.mxu0 0.0
  %1767 = vmatprep.subr.mxu0 0.0
  %1768 = vmatpush1.xpose.msra.mxu0 0.0
  %1769 = vmatprep.subr.mxu0 0.0
  %1770 = vmatpush1.xpose.msra.mxu0 0.0
  %1771 = vmatprep.subr.mxu0 0.0
  %1772 = vmatpush1.xpose.msra.mxu0 0.0
  %1773 = vmatprep.subr.mxu0 0.0
  %1774 = vmatpush1.xpose.msra.mxu0 0.0
  %1775 = vmatprep.subr.mxu0 0.0
  %1776 = vmatpush1.xpose.msra.mxu0 0.0
  %1777 = vmatprep.subr.mxu0 0.0
  %1778 = vmatpush1.xpose.msra.mxu0 0.0
  %1779 = vmatprep.subr.mxu0 0.0
  %1780 = vmatpush1.xpose.msra.mxu0 0.0
  %1781 = vmatprep.subr.mxu0 0.0
  %1782 = vmatpush1.xpose.msra.mxu0 0.0
  %1783 = vmatprep.subr.mxu0 0.0
  %1784 = vmatpush1.xpose.msra.mxu0 0.0
  %1785 = vmatprep.subr.mxu0 0.0
  %1786 = vmatpush1.xpose.msra.mxu0 0.0
  %1787 = vmatprep.subr.mxu0 0.0
  %1788 = vmatpush1.xpose.msra.mxu0 0.0
  %1789 = vmatprep.mubr.f32.mxu0 0.0
  %1790 = vmatmul.mubr.f32.gmra.mrb[0].mxu0 %v1721
  %v1791 = vpop.f32.mrb[0].mxu0
  %v1792 = vadd.f32 0.0, %v1791
  %v1793 = vpop.f32.mrb[0].mxu0
  %1794 = vdwg.mxu0
  %v1795 = vmul.f32 %v1792, 0.35355338
  %v1796 = vsel %vm150, %v1795, -inf
  %1797 = vmax.xlane.f32.xlu0 %v1796
  %v1798 = vpop.xlane.xlu0 %1797
  %v1799 = vsub.f32 %v1795, %v1798
  %v1800 = vmul.f32 %v1799, 1.442695
  %v1801 = vpow.pop %v1800
  %v1802 = vsel %vm150, %v1801, 0.0
  %1803 = vadd.xlane.f32.xlu0 %v1802
  %v1804 = vpop.xlane.xlu0 %1803
  %v1805 = vrcp.pop %v1804
  %v1806 = vmul.f32 %v1801, %v1805
  %1807 = vrot.lane.b32.xlu0 %v1217, 40
  %v1808 = vpop.permute.xlu0 %1807
  %v1811 = vsel %vm150, %v1806, 0
  %1813 = vmatprep.subr.mxu0 0.0
  %1814 = vmatpush1.msra.mxu0 %v1808
  %1815 = vmatprep.subr.mxu0 0.0
  %1816 = vmatpush1.msra.mxu0 0.0
  %1817 = vmatprep.subr.mxu0 0.0
  %1818 = vmatpush1.msra.mxu0 0.0
  %1819 = vmatprep.subr.mxu0 0.0
  %1820 = vmatpush1.msra.mxu0 0.0
  %1821 = vmatprep.subr.mxu0 0.0
  %1822 = vmatpush1.msra.mxu0 0.0
  %1823 = vmatprep.subr.mxu0 0.0
  %1824 = vmatpush1.msra.mxu0 0.0
  %1825 = vmatprep.subr.mxu0 0.0
  %1826 = vmatpush1.msra.mxu0 0.0
  %1827 = vmatprep.subr.mxu0 0.0
  %1828 = vmatpush1.msra.mxu0 0.0
  %1829 = vmatprep.subr.mxu0 0.0
  %1830 = vmatpush1.msra.mxu0 0.0
  %1831 = vmatprep.subr.mxu0 0.0
  %1832 = vmatpush1.msra.mxu0 0.0
  %1833 = vmatprep.subr.mxu0 0.0
  %1834 = vmatpush1.msra.mxu0 0.0
  %1835 = vmatprep.subr.mxu0 0.0
  %1836 = vmatpush1.msra.mxu0 0.0
  %1837 = vmatprep.subr.mxu0 0.0
  %1838 = vmatpush1.msra.mxu0 0.0
  %1839 = vmatprep.subr.mxu0 0.0
  %1840 = vmatpush1.msra.mxu0 0.0
  %1841 = vmatprep.subr.mxu0 0.0
  %1842 = vmatpush1.msra.mxu0 0.0
  %1843 = vmatprep.subr.mxu0 0.0
  %1844 = vmatpush1.msra.mxu0 0.0
  %1845 = vmatprep.subr.mxu0 0.0
  %1846 = vmatpush1.msra.mxu0 0.0
  %1847 = vmatprep.subr.mxu0 0.0
  %1848 = vmatpush1.msra.mxu0 0.0
  %1849 = vmatprep.subr.mxu0 0.0
  %1850 = vmatpush1.msra.mxu0 0.0
  %1851 = vmatprep.subr.mxu0 0.0
  %1852 = vmatpush1.msra.mxu0 0.0
  %1853 = vmatprep.subr.mxu0 0.0
  %1854 = vmatpush1.msra.mxu0 0.0
  %1855 = vmatprep.subr.mxu0 0.0
  %1856 = vmatpush1.msra.mxu0 0.0
  %1857 = vmatprep.subr.mxu0 0.0
  %1858 = vmatpush1.msra.mxu0 0.0
  %1859 = vmatprep.subr.mxu0 0.0
  %1860 = vmatpush1.msra.mxu0 0.0
  %1861 = vmatprep.subr.mxu0 0.0
  %1862 = vmatpush1.msra.mxu0 0.0
  %1863 = vmatprep.subr.mxu0 0.0
  %1864 = vmatpush1.msra.mxu0 0.0
  %1865 = vmatprep.subr.mxu0 0.0
  %1866 = vmatpush1.msra.mxu0 0.0
  %1867 = vmatprep.subr.mxu0 0.0
  %1868 = vmatpush1.msra.mxu0 0.0
  %1869 = vmatprep.subr.mxu0 0.0
  %1870 = vmatpush1.msra.mxu0 0.0
  %1871 = vmatprep.subr.mxu0 0.0
  %1872 = vmatpush1.msra.mxu0 0.0
  %1873 = vmatprep.subr.mxu0 0.0
  %1874 = vmatpush1.msra.mxu0 0.0
  %1875 = vmatprep.subr.mxu0 0.0
  %1876 = vmatpush1.msra.mxu0 0.0
  %1877 = vmatprep.mubr.f32.mxu0 0.0
  %1878 = vmatmul.mubr.f32.gmra.mrb[0].mxu0 %v1811
  %v1879 = vpop.f32.mrb[0].mxu0
  %v1880 = vadd.f32 0.0, %v1879
  %v1881 = vpop.f32.mrb[0].mxu0
  %1882 = vdwg.mxu0
  %1884 = vrot.lane.b32.xlu0 %v1548, 8
  %v1885 = vpop.permute.xlu0 %1884
  %1888 = vrot.lane.b32.xlu0 %v1714, 16
  %v1889 = vpop.permute.xlu0 %1888
  %1892 = vrot.lane.b32.xlu0 %v1880, 24
  %v1893 = vpop.permute.xlu0 %1892
  %v1895 = vsel %vm150, %v1382, %v1885
  %v1896 = vsel %vm42, %v1895, %v1889
  %v1897 = vsel %vm825, %v1896, %v1893
  %v1898 = vlaneseq
  %v1899 = vshrl.u32 %v1898, 7
  %v1900 = vsub.s32 0, %v1899
  %v1901 = vrot.slane %v1140, %v1900
  %v1903 = vsel %vm73, %v1897, 0
  %1905 = vmatprep.subr.mxu0 0.0
  %1906 = vmatpush1.msra.mxu0 %v1119
  %1907 = vmatprep.subr.mxu0 0.0
  %1908 = vmatpush1.msra.mxu0 %v1120
  %1909 = vmatprep.subr.mxu0 0.0
  %1910 = vmatpush1.msra.mxu0 %v1121
  %1911 = vmatprep.subr.mxu0 0.0
  %1912 = vmatpush1.msra.mxu0 %v1122
  %1913 = vmatprep.subr.mxu0 0.0
  %1914 = vmatpush1.msra.mxu0 0.0
  %1915 = vmatprep.subr.mxu0 0.0
  %1916 = vmatpush1.msra.mxu0 0.0
  %1917 = vmatprep.subr.mxu0 0.0
  %1918 = vmatpush1.msra.mxu0 0.0
  %1919 = vmatprep.subr.mxu0 0.0
  %1920 = vmatpush1.msra.mxu0 0.0
  %1921 = vmatprep.subr.mxu0 0.0
  %1922 = vmatpush1.msra.mxu0 0.0
  %1923 = vmatprep.subr.mxu0 0.0
  %1924 = vmatpush1.msra.mxu0 0.0
  %1925 = vmatprep.subr.mxu0 0.0
  %1926 = vmatpush1.msra.mxu0 0.0
  %1927 = vmatprep.subr.mxu0 0.0
  %1928 = vmatpush1.msra.mxu0 0.0
  %1929 = vmatprep.subr.mxu0 0.0
  %1930 = vmatpush1.msra.mxu0 0.0
  %1931 = vmatprep.subr.mxu0 0.0
  %1932 = vmatpush1.msra.mxu0 0.0
  %1933 = vmatprep.subr.mxu0 0.0
  %1934 = vmatpush1.msra.mxu0 0.0
  %1935 = vmatprep.subr.mxu0 0.0
  %1936 = vmatpush1.msra.mxu0 0.0
  %1937 = vmatprep.subr.mxu0 0.0
  %1938 = vmatpush1.msra.mxu0 0.0
  %1939 = vmatprep.subr.mxu0 0.0
  %1940 = vmatpush1.msra.mxu0 0.0
  %1941 = vmatprep.subr.mxu0 0.0
  %1942 = vmatpush1.msra.mxu0 0.0
  %1943 = vmatprep.subr.mxu0 0.0
  %1944 = vmatpush1.msra.mxu0 0.0
  %1945 = vmatprep.subr.mxu0 0.0
  %1946 = vmatpush1.msra.mxu0 0.0
  %1947 = vmatprep.subr.mxu0 0.0
  %1948 = vmatpush1.msra.mxu0 0.0
  %1949 = vmatprep.subr.mxu0 0.0
  %1950 = vmatpush1.msra.mxu0 0.0
  %1951 = vmatprep.subr.mxu0 0.0
  %1952 = vmatpush1.msra.mxu0 0.0
  %1953 = vmatprep.subr.mxu0 0.0
  %1954 = vmatpush1.msra.mxu0 0.0
  %1955 = vmatprep.subr.mxu0 0.0
  %1956 = vmatpush1.msra.mxu0 0.0
  %1957 = vmatprep.subr.mxu0 0.0
  %1958 = vmatpush1.msra.mxu0 0.0
  %1959 = vmatprep.subr.mxu0 0.0
  %1960 = vmatpush1.msra.mxu0 0.0
  %1961 = vmatprep.subr.mxu0 0.0
  %1962 = vmatpush1.msra.mxu0 0.0
  %1963 = vmatprep.subr.mxu0 0.0
  %1964 = vmatpush1.msra.mxu0 0.0
  %1965 = vmatprep.subr.mxu0 0.0
  %1966 = vmatpush1.msra.mxu0 0.0
  %1967 = vmatprep.subr.mxu0 0.0
  %1968 = vmatpush1.msra.mxu0 0.0
  %1969 = vmatprep.mubr.f32.mxu0 0.0
  %1970 = vmatmul.mubr.f32.gmra.mrb[0].mxu0 %v1903
  %v1971 = vpop.f32.mrb[0].mxu0
  %v1972 = vadd.f32 %v1901, %v1971
  %v1973 = vpop.f32.mrb[0].mxu0
  %1974 = vdwg.mxu0
  %v1975 = vadd.f32 %v1110, %v1972
  %v1976 = vsel %vm73, %v1975, 0.0
  %1977 = vadd.xlane.f32.xlu0 %v1976
  %v1978 = vpop.xlane.xlu0 %1977
  %v1979 = vmul.f32 %v1978, %v908
  %v1980 = vsub.f32 %v1975, %v1979
  %v1981 = vmul.f32 %v1980, %v1980
  %v1982 = vsel %vm73, %v1981, 0.0
  %1983 = vadd.xlane.f32.xlu0 %v1982
  %v1984 = vpop.xlane.xlu0 %1983
  %v1985 = vmul.f32 %v1984, %v908
  %v1986 = vadd.f32 %v1985, 1e-05
  %v1987 = vrsqrt.pop %v1986
  %v1988 = vmul.f32 %v1980, %v1987
  %v1989 = vlaneseq
  %v1990 = vshrl.u32 %v1989, 7
  %v1991 = vsub.s32 1, %v1990
  %v1992 = vrot.slane %v1140, %v1991
  %v1993 = vmul.f32 %v1988, %v1992
  %v1994 = vlaneseq
  %v1995 = vshrl.u32 %v1994, 7
  %v1996 = vsub.s32 2, %v1995
  %v1997 = vrot.slane %v1140, %v1996
  %v1998 = vadd.f32 %v1993, %v1997
  %v2000 = vlaneseq
  %v2001 = vshrl.u32 %v2000, 7
  %v2002 = vsub.s32 0, %v2001
  %v2003 = vrot.slane %v1129, %v2002
  %v2006 = vsel %vm73, %v1998, 0
  %2008 = vmatprep.subr.mxu0 0.0
  %2009 = vmatpush1.msra.mxu0 %v1124
  %2010 = vmatprep.subr.mxu0 0.0
  %2011 = vmatpush1.msra.mxu0 %v1125
  %2012 = vmatprep.subr.mxu0 0.0
  %2013 = vmatpush1.msra.mxu0 %v1126
  %2014 = vmatprep.subr.mxu0 0.0
  %2015 = vmatpush1.msra.mxu0 %v1127
  %2016 = vmatprep.subr.mxu0 0.0
  %2017 = vmatpush1.msra.mxu0 0.0
  %2018 = vmatprep.subr.mxu0 0.0
  %2019 = vmatpush1.msra.mxu0 0.0
  %2020 = vmatprep.subr.mxu0 0.0
  %2021 = vmatpush1.msra.mxu0 0.0
  %2022 = vmatprep.subr.mxu0 0.0
  %2023 = vmatpush1.msra.mxu0 0.0
  %2024 = vmatprep.subr.mxu0 0.0
  %2025 = vmatpush1.msra.mxu0 0.0
  %2026 = vmatprep.subr.mxu0 0.0
  %2027 = vmatpush1.msra.mxu0 0.0
  %2028 = vmatprep.subr.mxu0 0.0
  %2029 = vmatpush1.msra.mxu0 0.0
  %2030 = vmatprep.subr.mxu0 0.0
  %2031 = vmatpush1.msra.mxu0 0.0
  %2032 = vmatprep.subr.mxu0 0.0
  %2033 = vmatpush1.msra.mxu0 0.0
  %2034 = vmatprep.subr.mxu0 0.0
  %2035 = vmatpush1.msra.mxu0 0.0
  %2036 = vmatprep.subr.mxu0 0.0
  %2037 = vmatpush1.msra.mxu0 0.0
  %2038 = vmatprep.subr.mxu0 0.0
  %2039 = vmatpush1.msra.mxu0 0.0
  %2040 = vmatprep.subr.mxu0 0.0
  %2041 = vmatpush1.msra.mxu0 0.0
  %2042 = vmatprep.subr.mxu0 0.0
  %2043 = vmatpush1.msra.mxu0 0.0
  %2044 = vmatprep.subr.mxu0 0.0
  %2045 = vmatpush1.msra.mxu0 0.0
  %2046 = vmatprep.subr.mxu0 0.0
  %2047 = vmatpush1.msra.mxu0 0.0
  %2048 = vmatprep.subr.mxu0 0.0
  %2049 = vmatpush1.msra.mxu0 0.0
  %2050 = vmatprep.subr.mxu0 0.0
  %2051 = vmatpush1.msra.mxu0 0.0
  %2052 = vmatprep.subr.mxu0 0.0
  %2053 = vmatpush1.msra.mxu0 0.0
  %2054 = vmatprep.subr.mxu0 0.0
  %2055 = vmatpush1.msra.mxu0 0.0
  %2056 = vmatprep.subr.mxu0 0.0
  %2057 = vmatpush1.msra.mxu0 0.0
  %2058 = vmatprep.subr.mxu0 0.0
  %2059 = vmatpush1.msra.mxu0 0.0
  %2060 = vmatprep.subr.mxu0 0.0
  %2061 = vmatpush1.msra.mxu0 0.0
  %2062 = vmatprep.subr.mxu0 0.0
  %2063 = vmatpush1.msra.mxu0 0.0
  %2064 = vmatprep.subr.mxu0 0.0
  %2065 = vmatpush1.msra.mxu0 0.0
  %2066 = vmatprep.subr.mxu0 0.0
  %2067 = vmatpush1.msra.mxu0 0.0
  %2068 = vmatprep.subr.mxu0 0.0
  %2069 = vmatpush1.msra.mxu0 0.0
  %2070 = vmatprep.subr.mxu0 0.0
  %2071 = vmatpush1.msra.mxu0 0.0
  %2072 = vmatprep.mubr.f32.mxu0 0.0
  %2073 = vmatmul.mubr.f32.gmra.mrb[0].mxu0 %v2006
  %v2074 = vpop.f32.mrb[0].mxu0
  %v2075 = vadd.f32 %v2003, %v2074
  %v2076 = vpop.f32.mrb[0].mxu0
  %2077 = vdwg.mxu0
  %v2078 = vmax.f32 %v2075, 0.0
  %v2079 = vlaneseq
  %v2080 = vshrl.u32 %v2079, 7
  %v2081 = vsub.s32 3, %v2080
  %v2082 = vrot.slane %v1140, %v2081
  %v2084 = vsel %vm1013, %v2078, 0
  %2086 = vmatprep.subr.mxu0 0.0
  %2087 = vmatpush1.msra.mxu0 %v1131
  %2088 = vmatprep.subr.mxu0 0.0
  %2089 = vmatpush1.msra.mxu0 %v1132
  %2090 = vmatprep.subr.mxu0 0.0
  %2091 = vmatpush1.msra.mxu0 %v1133
  %2092 = vmatprep.subr.mxu0 0.0
  %2093 = vmatpush1.msra.mxu0 %v1134
  %2094 = vmatprep.subr.mxu0 0.0
  %2095 = vmatpush1.msra.mxu0 %v1135
  %2096 = vmatprep.subr.mxu0 0.0
  %2097 = vmatpush1.msra.mxu0 %v1136
  %2098 = vmatprep.subr.mxu0 0.0
  %2099 = vmatpush1.msra.mxu0 %v1137
  %2100 = vmatprep.subr.mxu0 0.0
  %2101 = vmatpush1.msra.mxu0 %v1138
  %2102 = vmatprep.subr.mxu0 0.0
  %2103 = vmatpush1.msra.mxu0 0.0
  %2104 = vmatprep.subr.mxu0 0.0
  %2105 = vmatpush1.msra.mxu0 0.0
  %2106 = vmatprep.subr.mxu0 0.0
  %2107 = vmatpush1.msra.mxu0 0.0
  %2108 = vmatprep.subr.mxu0 0.0
  %2109 = vmatpush1.msra.mxu0 0.0
  %2110 = vmatprep.subr.mxu0 0.0
  %2111 = vmatpush1.msra.mxu0 0.0
  %2112 = vmatprep.subr.mxu0 0.0
  %2113 = vmatpush1.msra.mxu0 0.0
  %2114 = vmatprep.subr.mxu0 0.0
  %2115 = vmatpush1.msra.mxu0 0.0
  %2116 = vmatprep.subr.mxu0 0.0
  %2117 = vmatpush1.msra.mxu0 0.0
  %2118 = vmatprep.subr.mxu0 0.0
  %2119 = vmatpush1.msra.mxu0 0.0
  %2120 = vmatprep.subr.mxu0 0.0
  %2121 = vmatpush1.msra.mxu0 0.0
  %2122 = vmatprep.subr.mxu0 0.0
  %2123 = vmatpush1.msra.mxu0 0.0
  %2124 = vmatprep.subr.mxu0 0.0
  %2125 = vmatpush1.msra.mxu0 0.0
  %2126 = vmatprep.subr.mxu0 0.0
  %2127 = vmatpush1.msra.mxu0 0.0
  %2128 = vmatprep.subr.mxu0 0.0
  %2129 = vmatpush1.msra.mxu0 0.0
  %2130 = vmatprep.subr.mxu0 0.0
  %2131 = vmatpush1.msra.mxu0 0.0
  %2132 = vmatprep.subr.mxu0 0.0
  %2133 = vmatpush1.msra.mxu0 0.0
  %2134 = vmatprep.subr.mxu0 0.0
  %2135 = vmatpush1.msra.mxu0 0.0
  %2136 = vmatprep.subr.mxu0 0.0
  %2137 = vmatpush1.msra.mxu0 0.0
  %2138 = vmatprep.subr.mxu0 0.0
  %2139 = vmatpush1.msra.mxu0 0.0
  %2140 = vmatprep.subr.mxu0 0.0
  %2141 = vmatpush1.msra.mxu0 0.0
  %2142 = vmatprep.subr.mxu0 0.0
  %2143 = vmatpush1.msra.mxu0 0.0
  %2144 = vmatprep.subr.mxu0 0.0
  %2145 = vmatpush1.msra.mxu0 0.0
  %2146 = vmatprep.subr.mxu0 0.0
  %2147 = vmatpush1.msra.mxu0 0.0
  %2148 = vmatprep.subr.mxu0 0.0
  %2149 = vmatpush1.msra.mxu0 0.0
  %2150 = vmatprep.mubr.f32.mxu0 0.0
  %2151 = vmatmul.mubr.f32.gmra.mrb[0].mxu0 %v2084
  %v2152 = vpop.f32.mrb[0].mxu0
  %v2153 = vadd.f32 %v2082, %v2152
  %v2154 = vpop.f32.mrb[0].mxu0
  %2155 = vdwg.mxu0
  %v2156 = vadd.f32 %v1998, %v2153
  %v2157 = vsel %vm73, %v2156, 0.0
  %2158 = vadd.xlane.f32.xlu0 %v2157
  %v2159 = vpop.xlane.xlu0 %2158
  %v2160 = vmul.f32 %v2159, %v908
  %v2161 = vsub.f32 %v2156, %v2160
  %v2162 = vmul.f32 %v2161, %v2161
  %v2163 = vsel %vm73, %v2162, 0.0
  %2164 = vadd.xlane.f32.xlu0 %v2163
  %v2165 = vpop.xlane.xlu0 %2164
  %v2166 = vmul.f32 %v2165, %v908
  %v2167 = vadd.f32 %v2166, 1e-05
  %v2168 = vrsqrt.pop %v2167
  %v2169 = vmul.f32 %v2161, %v2168
  %v2170 = vlaneseq
  %v2171 = vshrl.u32 %v2170, 7
  %v2172 = vsub.s32 4, %v2171
  %v2173 = vrot.slane %v1140, %v2172
  %v2174 = vmul.f32 %v2169, %v2173
  %v2175 = vlaneseq
  %v2176 = vshrl.u32 %v2175, 7
  %v2177 = vsub.s32 5, %v2176
  %v2178 = vrot.slane %v1140, %v2177
  %v2179 = vadd.f32 %v2174, %v2178
  %v2180 = vld [vmem:[%s8] sm:$0x1]
  %v2182 = vlaneseq
  %v2183 = vshrl.u32 %v2182, 7
  %v2184 = vsub.s32 0, %v2183
  %v2185 = vrot.slane %v2180, %v2184
  %v2187 = vmul.f32 %v2179, %v2185
  %v2188 = vsel %vm73, %v2187, 0.0
  %2189 = vadd.xlane.f32.xlu0 %v2188
  %v2190 = vpop.xlane.xlu0 %2189
  %v2191 = vld [vmem:[#allocation2] sm:$0x1]
  %v2193 = vlaneseq
  %v2194 = vshrl.u32 %v2193, 7
  %v2195 = vsub.s32 0, %v2194
  %v2196 = vrot.slane %v2191, %v2195
  %v2198 = vadd.f32 %v2190, %v2196
  %2200 = vset.pattern.permute.xlu0 0
  %2201 = vperm.xlu0 %2200, %v2198
  %v2202 = vpop.permute.xlu0 %2201
  %2204 = vst [vmem:[%s10] sm:$0xff] %v2202
  // Predicated region
  $region42: #{youtube_predictor_forward.1} parent=0 // pred_check
    _
  $region43: #{youtube_predictor_forward.1} parent=0 // pred_check_branch
    %2206 = sbr.rel (0) target = $region45
  $region44: #{youtube_predictor_forward.1} parent=0 // pred_region
    _
  $region45: #{youtube_predictor_forward.1} parent=0 // pred_fallthru
    _
  // Predicated region
  $region46: #{youtube_predictor_forward.1} parent=0 // pred_check
    _
  $region47: #{youtube_predictor_forward.1} parent=0 // pred_check_branch
    %2208 = sbr.rel (0) target = $region49
  $region48: #{youtube_predictor_forward.1} parent=0 // pred_region
    _
  $region49: #{youtube_predictor_forward.1} parent=0 // pred_fallthru
    _

</llo_original>
